<compile_context>
chip_gen: v7x
topology: tpu7x:2x2x1
jax: 0.10.0
libtpu: 0.0.40
codegen_flags: <defaults>
</compile_context>

<pallas_src>
import functools

import jax
import jax.numpy as jnp
import numpy as np
from jax.experimental import pallas as pl
from jax.experimental.pallas import tpu as pltpu

EPS = 1e-5  # nn.BatchNorm2d default


# ----------------------------------------------------------------------------
# Kernel 1: 3x3 conv (9 shifted MXU matmuls, lane-dense) + bias
#           + per-image per-channel sum and centred sum-of-squares.
# ----------------------------------------------------------------------------
def _conv_stats_kernel(x_ref, w_ref, m_ref, b_ref, y_ref, s1_ref, s2_ref, *, W, P):
    """x_ref: (1, Cin, S+2P) bf16 flat-padded upsampled image.
       w_ref: (9, Cout, Cin) bf16 transposed taps.
       m_ref: (3, S) f32 column-validity masks (dx = -1, 0, +1).
       b_ref: (Cout, 1) f32 conv bias.
       y_ref: (1, Cout, S) f32 pre-BN conv output (lane-dense).
       s1_ref/s2_ref: (1, Cout, 1) f32 per-image sum / centred sum-of-squares."""
    Cout = w_ref.shape[1]
    S = y_ref.shape[2]

    acc = jnp.zeros((Cout, S), jnp.float32)
    t = 0
    for dy in (-1, 0, 1):
        for dx in (-1, 0, 1):
            d = dy * W + dx
            # static lane-offset window of the flat padded spatial axis
            window = x_ref[0, :, P + d:P + d + S]          # (Cin, S) bf16
            tap = jnp.dot(w_ref[t], window,                 # (Cout, S) f32, MXU
                          preferred_element_type=jnp.float32)
            if dx == 0:
                acc = acc + tap
            else:
                # zero the lanes whose horizontal neighbour is out of the image
                acc = acc + tap * m_ref[dx + 1:dx + 2, :]
            t += 1

    acc = acc + b_ref[...]                                  # (Cout, 1) broadcast
    y_ref[0] = acc

    # per-image statistics (centred second moment -> numerically stable pooling)
    s1 = jnp.sum(acc, axis=1, keepdims=True)                # (Cout, 1)
    mu = s1 * (1.0 / S)
    dlt = acc - mu
    s2 = jnp.sum(dlt * dlt, axis=1, keepdims=True)          # (Cout, 1)
    s1_ref[0] = s1
    s2_ref[0] = s2


# ----------------------------------------------------------------------------
# Kernel 2: y = relu(x * scale + shift)   (BN affine folded into scale/shift)
# ----------------------------------------------------------------------------
def _bn_relu_kernel(x_ref, scale_ref, shift_ref, o_ref):
    y = x_ref[0] * scale_ref[...] + shift_ref[...]
    o_ref[0] = jnp.maximum(y, 0.0)


def _largest_tile(s, cap=32768):
    """Largest multiple-of-128 divisor of s that is <= cap (or s itself)."""
    if s <= cap:
        return s
    t = (cap // 128) * 128
    while t >= 128:
        if s % t == 0:
            return t
        t -= 128
    return s


# ----------------------------------------------------------------------------
# Wrapper
# ----------------------------------------------------------------------------
def up_conv_forward(x_nchw, w_hwio, b, gamma, beta):
    """x_nchw: (N, Cin, Hin, Win) f32.  Returns (N, Cout, 2*Hin, 2*Win) f32."""
    N, Cin, Hin, Win = x_nchw.shape
    Cout = w_hwio.shape[-1]
    H, W = 2 * Hin, 2 * Win
    S = H * W
    P = W + 1                       # flat padding covers every |dy*W + dx| <= W+1
    Sp = S + 2 * P

    # --- cheap XLA glue -------------------------------------------------------
    # nearest-neighbour 2x upsample, cast to bf16 for the MXU, flatten spatial so
    # H*W sits on the lane axis, and zero-pad the flat axis for the tap windows.
    # TODO(synk): fold the 2x nearest upsample into the kernel (parity-decomposed
    # taps) to also remove the 4x upsampled intermediate from HBM.
    xu = jnp.repeat(jnp.repeat(x_nchw, 2, axis=2), 2, axis=3)
    xf = xu.astype(jnp.bfloat16).reshape(N, Cin, S)
    xfp = jnp.pad(xf, ((0, 0), (0, 0), (P, P)))

    # per-tap transposed weights: wt[t] = w[ky, kx].T -> (Cout, Cin)
    wt = jnp.transpose(w_hwio, (0, 1, 3, 2)).reshape(9, Cout, Cin).astype(jnp.bfloat16)

    # column-validity masks (row validity is handled by the flat zero padding)
    col = np.arange(S) % W
    cmask = jnp.asarray(np.stack([(col >= 1).astype(np.float32),
                                  np.ones((S,), np.float32),
                                  (col <= W - 2).astype(np.float32)], axis=0))

    b2 = b.reshape(Cout, 1).astype(jnp.float32)

    conv_flat, s1, s2 = pl.pallas_call(
        functools.partial(_conv_stats_kernel, W=W, P=P),
        out_shape=(jax.ShapeDtypeStruct((N, Cout, S), jnp.float32),
                   jax.ShapeDtypeStruct((N, Cout, 1), jnp.float32),
                   jax.ShapeDtypeStruct((N, Cout, 1), jnp.float32)),
        grid=(N,),
        in_specs=[pl.BlockSpec((1, Cin, Sp), lambda n: (n, 0, 0)),
                  pl.BlockSpec((9, Cout, Cin), lambda n: (0, 0, 0)),
                  pl.BlockSpec((3, S), lambda n: (0, 0)),
                  pl.BlockSpec((Cout, 1), lambda n: (0, 0))],
        out_specs=(pl.BlockSpec((1, Cout, S), lambda n: (n, 0, 0)),
                   pl.BlockSpec((1, Cout, 1), lambda n: (n, 0, 0)),
                   pl.BlockSpec((1, Cout, 1), lambda n: (n, 0, 0))),
        compiler_params=pltpu.CompilerParams(dimension_semantics=("parallel",)),
    )(xfp, wt, cmask, b2)

    # --- BatchNorm (train-mode) statistics: pooled from per-image moments ------
    cnt = float(N * S)
    mean_img = s1[:, :, 0] / float(S)                               # (N, Cout)
    mean = jnp.mean(mean_img, axis=0)                               # (Cout,)
    m2_within = jnp.sum(s2[:, :, 0], axis=0)                        # (Cout,)
    m2_between = float(S) * jnp.sum((mean_img - mean[None, :]) ** 2, axis=0)
    var = (m2_within + m2_between) / cnt                            # biased var
    inv = jax.lax.rsqrt(var + EPS)
    scale = (gamma * inv).astype(jnp.float32).reshape(Cout, 1)
    shift = (beta - mean * gamma * inv).astype(jnp.float32).reshape(Cout, 1)

    ts = _largest_tile(S)
    out_flat = pl.pallas_call(
        _bn_relu_kernel,
        out_shape=jax.ShapeDtypeStruct((N, Cout, S), jnp.float32),
        grid=(N, S // ts),
        in_specs=[pl.BlockSpec((1, Cout, ts), lambda n, s: (n, 0, s)),
                  pl.BlockSpec((Cout, 1), lambda n, s: (0, 0)),
                  pl.BlockSpec((Cout, 1), lambda n, s: (0, 0))],
        out_specs=pl.BlockSpec((1, Cout, ts), lambda n, s: (n, 0, s)),
        compiler_params=pltpu.CompilerParams(
            dimension_semantics=("parallel", "parallel")),
    )(conv_flat, scale, shift)

    return out_flat.reshape(N, Cout, H, W)   # already NCHW; reshape is free


# ----------------------------------------------------------------------------
# Pure-JAX reference (matches the PyTorch module forward, train-mode BN)
# ----------------------------------------------------------------------------
def ref_up_conv(x_nchw, w_hwio, b, gamma, beta, conv_dtype=jnp.float32):
    w_oihw = jnp.transpose(w_hwio, (3, 2, 0, 1)).astype(conv_dtype)
    up = jnp.repeat(jnp.repeat(x_nchw, 2, axis=2), 2, axis=3).astype(conv_dtype)
    y = jax.lax.conv_general_dilated(
        up, w_oihw, window_strides=(1, 1), padding=((1, 1), (1, 1)),
        dimension_numbers=("NCHW", "OIHW", "NCHW"),
        preferred_element_type=jnp.float32)
    y = y + b[None, :, None, None]
    mean = y.mean(axis=(0, 2, 3), keepdims=True)
    var = ((y - mean) ** 2).mean(axis=(0, 2, 3), keepdims=True)
    y = (y - mean) * jax.lax.rsqrt(var + EPS)
    y = y * gamma[None, :, None, None] + beta[None, :, None, None]
    return jnp.maximum(y, 0.0)


if __name__ == "__main__":
    key = jax.random.PRNGKey(0)
    k1, k2, k3, k4, k5 = jax.random.split(key, 5)

    N, Cin, Hin, Win, Cout = 2, 4, 16, 16, 8
    x = jax.random.normal(k1, (N, Cin, Hin, Win), jnp.float32)
    # deterministic synthetic parameters (shapes per nn.Conv2d / nn.BatchNorm2d)
    w_hwio = 0.1 * jax.random.normal(k2, (3, 3, Cin, Cout), jnp.float32)
    b = 0.1 * jax.random.normal(k3, (Cout,), jnp.float32)
    gamma = 1.0 + 0.1 * jax.random.normal(k4, (Cout,), jnp.float32)
    beta = 0.1 * jax.random.normal(k5, (Cout,), jnp.float32)

    out = up_conv_forward(x, w_hwio, b, gamma, beta)
    out = jax.block_until_ready(out)
    assert out.shape == (N, Cout, 2 * Hin, 2 * Win)

    # tight check against a reference using the same bf16 matmul inputs
    ref_b = ref_up_conv(x, w_hwio, b, gamma, beta, conv_dtype=jnp.bfloat16)
    np.testing.assert_allclose(np.asarray(out), np.asarray(ref_b),
                               rtol=2e-3, atol=2e-3)
    # semantic check against the pure-f32 PyTorch-equivalent reference
    ref_f = ref_up_conv(x, w_hwio, b, gamma, beta, conv_dtype=jnp.float32)
    np.testing.assert_allclose(np.asarray(out), np.asarray(ref_f),
                               rtol=5e-2, atol=5e-2)
    print("KERNEL_OK")
</pallas_src>

<mosaic_0001>
module attributes {stable_mosaic.version = 11 : i64} {
  func.func @_conv_stats_kernel(%arg0: i32, %arg1: memref<1x4x1090xbf16, #tpu.memory_space<vmem>>, %arg2: memref<9x8x4xbf16, #tpu.memory_space<vmem>>, %arg3: memref<3x1024xf32, #tpu.memory_space<vmem>>, %arg4: memref<8x1xf32, #tpu.memory_space<vmem>>, %arg5: memref<1x8x1024xf32, #tpu.memory_space<vmem>>, %arg6: memref<1x8x1xf32, #tpu.memory_space<vmem>>, %arg7: memref<1x8x1xf32, #tpu.memory_space<vmem>>) attributes {dimension_semantics = [#tpu.dimension_semantics<parallel>], iteration_bounds = array<i64: 2>, scalar_prefetch = 0 : i64, scratch_operands = 0 : i64, tpu.core_type = #tpu.core_type<tc>, window_params = [{transform_indices = @transform_0, window_bounds = array<i64: 1, 4, 1090>}, {pipeline_mode = #tpu.pipeline_mode<synchronous>, transform_indices = @transform_1, window_bounds = array<i64: 9, 8, 4>}, {pipeline_mode = #tpu.pipeline_mode<synchronous>, transform_indices = @transform_2, window_bounds = array<i64: 3, 1024>}, {pipeline_mode = #tpu.pipeline_mode<synchronous>, transform_indices = @transform_3, window_bounds = array<i64: 8, 1>}, {transform_indices = @transform_4, window_bounds = array<i64: 1, 8, 1024>}, {transform_indices = @transform_5, window_bounds = array<i64: 1, 8, 1>}, {transform_indices = @transform_6, window_bounds = array<i64: 1, 8, 1>}]} {
    %cst = arith.constant 0.000000e+00 : f32
    %0 = vector.broadcast %cst : f32 to vector<8x1024xf32>
    %c0 = arith.constant 0 : index
    %c0_0 = arith.constant 0 : index
    %c0_1 = arith.constant 0 : index
    %1 = vector.load %arg1[%c0, %c0_0, %c0_1] : memref<1x4x1090xbf16, #tpu.memory_space<vmem>>, vector<1x4x1024xbf16>
    %2 = vector.shape_cast %1 : vector<1x4x1024xbf16> to vector<4x1024xbf16>
    %c0_2 = arith.constant 0 : index
    %c0_3 = arith.constant 0 : index
    %c0_4 = arith.constant 0 : index
    %3 = vector.load %arg2[%c0_2, %c0_3, %c0_4] : memref<9x8x4xbf16, #tpu.memory_space<vmem>>, vector<1x8x4xbf16>
    %4 = vector.shape_cast %3 : vector<1x8x4xbf16> to vector<8x4xbf16>
    %cst_5 = arith.constant dense<0.000000e+00> : vector<8x1024xf32>
    %5 = tpu.matmul %4, %2, %cst_5 {dimension_numbers = #tpu.dot_dimension_numbers<[1], [0], [0], [1], [0, 0, 1, 1], [], []>} : vector<8x4xbf16>, vector<4x1024xbf16>, vector<8x1024xf32> -> vector<8x1024xf32>
    %c0_6 = arith.constant 0 : index
    %c0_7 = arith.constant 0 : index
    %6 = vector.load %arg3[%c0_6, %c0_7] : memref<3x1024xf32, #tpu.memory_space<vmem>>, vector<1x1024xf32>
    %7 = vector.broadcast %6 : vector<1x1024xf32> to vector<8x1024xf32>
    %8 = arith.mulf %5, %7 : vector<8x1024xf32>
    %9 = arith.addf %0, %8 : vector<8x1024xf32>
    %c0_8 = arith.constant 0 : index
    %c0_9 = arith.constant 0 : index
    %c1 = arith.constant 1 : index
    %10 = vector.load %arg1[%c0_8, %c0_9, %c1] : memref<1x4x1090xbf16, #tpu.memory_space<vmem>>, vector<1x4x1024xbf16>
    %11 = vector.shape_cast %10 : vector<1x4x1024xbf16> to vector<4x1024xbf16>
    %c1_10 = arith.constant 1 : index
    %c0_11 = arith.constant 0 : index
    %c0_12 = arith.constant 0 : index
    %12 = vector.load %arg2[%c1_10, %c0_11, %c0_12] : memref<9x8x4xbf16, #tpu.memory_space<vmem>>, vector<1x8x4xbf16>
    %13 = vector.shape_cast %12 : vector<1x8x4xbf16> to vector<8x4xbf16>
    %cst_13 = arith.constant dense<0.000000e+00> : vector<8x1024xf32>
    %14 = tpu.matmul %13, %11, %cst_13 {dimension_numbers = #tpu.dot_dimension_numbers<[1], [0], [0], [1], [0, 0, 1, 1], [], []>} : vector<8x4xbf16>, vector<4x1024xbf16>, vector<8x1024xf32> -> vector<8x1024xf32>
    %15 = arith.addf %9, %14 : vector<8x1024xf32>
    %c0_14 = arith.constant 0 : index
    %c0_15 = arith.constant 0 : index
    %c2 = arith.constant 2 : index
    %16 = vector.load %arg1[%c0_14, %c0_15, %c2] : memref<1x4x1090xbf16, #tpu.memory_space<vmem>>, vector<1x4x1024xbf16>
    %17 = vector.shape_cast %16 : vector<1x4x1024xbf16> to vector<4x1024xbf16>
    %c2_16 = arith.constant 2 : index
    %c0_17 = arith.constant 0 : index
    %c0_18 = arith.constant 0 : index
    %18 = vector.load %arg2[%c2_16, %c0_17, %c0_18] : memref<9x8x4xbf16, #tpu.memory_space<vmem>>, vector<1x8x4xbf16>
    %19 = vector.shape_cast %18 : vector<1x8x4xbf16> to vector<8x4xbf16>
    %cst_19 = arith.constant dense<0.000000e+00> : vector<8x1024xf32>
    %20 = tpu.matmul %19, %17, %cst_19 {dimension_numbers = #tpu.dot_dimension_numbers<[1], [0], [0], [1], [0, 0, 1, 1], [], []>} : vector<8x4xbf16>, vector<4x1024xbf16>, vector<8x1024xf32> -> vector<8x1024xf32>
    %c2_20 = arith.constant 2 : index
    %c0_21 = arith.constant 0 : index
    %21 = vector.load %arg3[%c2_20, %c0_21] : memref<3x1024xf32, #tpu.memory_space<vmem>>, vector<1x1024xf32>
    %22 = vector.broadcast %21 : vector<1x1024xf32> to vector<8x1024xf32>
    %23 = arith.mulf %20, %22 : vector<8x1024xf32>
    %24 = arith.addf %15, %23 : vector<8x1024xf32>
    %c0_22 = arith.constant 0 : index
    %c0_23 = arith.constant 0 : index
    %c32 = arith.constant 32 : index
    %25 = vector.load %arg1[%c0_22, %c0_23, %c32] : memref<1x4x1090xbf16, #tpu.memory_space<vmem>>, vector<1x4x1024xbf16>
    %26 = vector.shape_cast %25 : vector<1x4x1024xbf16> to vector<4x1024xbf16>
    %c3 = arith.constant 3 : index
    %c0_24 = arith.constant 0 : index
    %c0_25 = arith.constant 0 : index
    %27 = vector.load %arg2[%c3, %c0_24, %c0_25] : memref<9x8x4xbf16, #tpu.memory_space<vmem>>, vector<1x8x4xbf16>
    %28 = vector.shape_cast %27 : vector<1x8x4xbf16> to vector<8x4xbf16>
    %cst_26 = arith.constant dense<0.000000e+00> : vector<8x1024xf32>
    %29 = tpu.matmul %28, %26, %cst_26 {dimension_numbers = #tpu.dot_dimension_numbers<[1], [0], [0], [1], [0, 0, 1, 1], [], []>} : vector<8x4xbf16>, vector<4x1024xbf16>, vector<8x1024xf32> -> vector<8x1024xf32>
    %c0_27 = arith.constant 0 : index
    %c0_28 = arith.constant 0 : index
    %30 = vector.load %arg3[%c0_27, %c0_28] : memref<3x1024xf32, #tpu.memory_space<vmem>>, vector<1x1024xf32>
    %31 = vector.broadcast %30 : vector<1x1024xf32> to vector<8x1024xf32>
    %32 = arith.mulf %29, %31 : vector<8x1024xf32>
    %33 = arith.addf %24, %32 : vector<8x1024xf32>
    %c0_29 = arith.constant 0 : index
    %c0_30 = arith.constant 0 : index
    %c33 = arith.constant 33 : index
    %34 = vector.load %arg1[%c0_29, %c0_30, %c33] : memref<1x4x1090xbf16, #tpu.memory_space<vmem>>, vector<1x4x1024xbf16>
    %35 = vector.shape_cast %34 : vector<1x4x1024xbf16> to vector<4x1024xbf16>
    %c4 = arith.constant 4 : index
    %c0_31 = arith.constant 0 : index
    %c0_32 = arith.constant 0 : index
    %36 = vector.load %arg2[%c4, %c0_31, %c0_32] : memref<9x8x4xbf16, #tpu.memory_space<vmem>>, vector<1x8x4xbf16>
    %37 = vector.shape_cast %36 : vector<1x8x4xbf16> to vector<8x4xbf16>
    %cst_33 = arith.constant dense<0.000000e+00> : vector<8x1024xf32>
    %38 = tpu.matmul %37, %35, %cst_33 {dimension_numbers = #tpu.dot_dimension_numbers<[1], [0], [0], [1], [0, 0, 1, 1], [], []>} : vector<8x4xbf16>, vector<4x1024xbf16>, vector<8x1024xf32> -> vector<8x1024xf32>
    %39 = arith.addf %33, %38 : vector<8x1024xf32>
    %c0_34 = arith.constant 0 : index
    %c0_35 = arith.constant 0 : index
    %c34 = arith.constant 34 : index
    %40 = vector.load %arg1[%c0_34, %c0_35, %c34] : memref<1x4x1090xbf16, #tpu.memory_space<vmem>>, vector<1x4x1024xbf16>
    %41 = vector.shape_cast %40 : vector<1x4x1024xbf16> to vector<4x1024xbf16>
    %c5 = arith.constant 5 : index
    %c0_36 = arith.constant 0 : index
    %c0_37 = arith.constant 0 : index
    %42 = vector.load %arg2[%c5, %c0_36, %c0_37] : memref<9x8x4xbf16, #tpu.memory_space<vmem>>, vector<1x8x4xbf16>
    %43 = vector.shape_cast %42 : vector<1x8x4xbf16> to vector<8x4xbf16>
    %cst_38 = arith.constant dense<0.000000e+00> : vector<8x1024xf32>
    %44 = tpu.matmul %43, %41, %cst_38 {dimension_numbers = #tpu.dot_dimension_numbers<[1], [0], [0], [1], [0, 0, 1, 1], [], []>} : vector<8x4xbf16>, vector<4x1024xbf16>, vector<8x1024xf32> -> vector<8x1024xf32>
    %c2_39 = arith.constant 2 : index
    %c0_40 = arith.constant 0 : index
    %45 = vector.load %arg3[%c2_39, %c0_40] : memref<3x1024xf32, #tpu.memory_space<vmem>>, vector<1x1024xf32>
    %46 = vector.broadcast %45 : vector<1x1024xf32> to vector<8x1024xf32>
    %47 = arith.mulf %44, %46 : vector<8x1024xf32>
    %48 = arith.addf %39, %47 : vector<8x1024xf32>
    %c0_41 = arith.constant 0 : index
    %c0_42 = arith.constant 0 : index
    %c64 = arith.constant 64 : index
    %49 = vector.load %arg1[%c0_41, %c0_42, %c64] : memref<1x4x1090xbf16, #tpu.memory_space<vmem>>, vector<1x4x1024xbf16>
    %50 = vector.shape_cast %49 : vector<1x4x1024xbf16> to vector<4x1024xbf16>
    %c6 = arith.constant 6 : index
    %c0_43 = arith.constant 0 : index
    %c0_44 = arith.constant 0 : index
    %51 = vector.load %arg2[%c6, %c0_43, %c0_44] : memref<9x8x4xbf16, #tpu.memory_space<vmem>>, vector<1x8x4xbf16>
    %52 = vector.shape_cast %51 : vector<1x8x4xbf16> to vector<8x4xbf16>
    %cst_45 = arith.constant dense<0.000000e+00> : vector<8x1024xf32>
    %53 = tpu.matmul %52, %50, %cst_45 {dimension_numbers = #tpu.dot_dimension_numbers<[1], [0], [0], [1], [0, 0, 1, 1], [], []>} : vector<8x4xbf16>, vector<4x1024xbf16>, vector<8x1024xf32> -> vector<8x1024xf32>
    %c0_46 = arith.constant 0 : index
    %c0_47 = arith.constant 0 : index
    %54 = vector.load %arg3[%c0_46, %c0_47] : memref<3x1024xf32, #tpu.memory_space<vmem>>, vector<1x1024xf32>
    %55 = vector.broadcast %54 : vector<1x1024xf32> to vector<8x1024xf32>
    %56 = arith.mulf %53, %55 : vector<8x1024xf32>
    %57 = arith.addf %48, %56 : vector<8x1024xf32>
    %c0_48 = arith.constant 0 : index
    %c0_49 = arith.constant 0 : index
    %c65 = arith.constant 65 : index
    %58 = vector.load %arg1[%c0_48, %c0_49, %c65] : memref<1x4x1090xbf16, #tpu.memory_space<vmem>>, vector<1x4x1024xbf16>
    %59 = vector.shape_cast %58 : vector<1x4x1024xbf16> to vector<4x1024xbf16>
    %c7 = arith.constant 7 : index
    %c0_50 = arith.constant 0 : index
    %c0_51 = arith.constant 0 : index
    %60 = vector.load %arg2[%c7, %c0_50, %c0_51] : memref<9x8x4xbf16, #tpu.memory_space<vmem>>, vector<1x8x4xbf16>
    %61 = vector.shape_cast %60 : vector<1x8x4xbf16> to vector<8x4xbf16>
    %cst_52 = arith.constant dense<0.000000e+00> : vector<8x1024xf32>
    %62 = tpu.matmul %61, %59, %cst_52 {dimension_numbers = #tpu.dot_dimension_numbers<[1], [0], [0], [1], [0, 0, 1, 1], [], []>} : vector<8x4xbf16>, vector<4x1024xbf16>, vector<8x1024xf32> -> vector<8x1024xf32>
    %63 = arith.addf %57, %62 : vector<8x1024xf32>
    %c0_53 = arith.constant 0 : index
    %c0_54 = arith.constant 0 : index
    %c66 = arith.constant 66 : index
    %64 = vector.load %arg1[%c0_53, %c0_54, %c66] : memref<1x4x1090xbf16, #tpu.memory_space<vmem>>, vector<1x4x1024xbf16>
    %65 = vector.shape_cast %64 : vector<1x4x1024xbf16> to vector<4x1024xbf16>
    %c8 = arith.constant 8 : index
    %c0_55 = arith.constant 0 : index
    %c0_56 = arith.constant 0 : index
    %66 = vector.load %arg2[%c8, %c0_55, %c0_56] : memref<9x8x4xbf16, #tpu.memory_space<vmem>>, vector<1x8x4xbf16>
    %67 = vector.shape_cast %66 : vector<1x8x4xbf16> to vector<8x4xbf16>
    %cst_57 = arith.constant dense<0.000000e+00> : vector<8x1024xf32>
    %68 = tpu.matmul %67, %65, %cst_57 {dimension_numbers = #tpu.dot_dimension_numbers<[1], [0], [0], [1], [0, 0, 1, 1], [], []>} : vector<8x4xbf16>, vector<4x1024xbf16>, vector<8x1024xf32> -> vector<8x1024xf32>
    %c2_58 = arith.constant 2 : index
    %c0_59 = arith.constant 0 : index
    %69 = vector.load %arg3[%c2_58, %c0_59] : memref<3x1024xf32, #tpu.memory_space<vmem>>, vector<1x1024xf32>
    %70 = vector.broadcast %69 : vector<1x1024xf32> to vector<8x1024xf32>
    %71 = arith.mulf %68, %70 : vector<8x1024xf32>
    %72 = arith.addf %63, %71 : vector<8x1024xf32>
    %c0_60 = arith.constant 0 : index
    %c0_61 = arith.constant 0 : index
    %73 = vector.load %arg4[%c0_60, %c0_61] : memref<8x1xf32, #tpu.memory_space<vmem>>, vector<8x1xf32>
    %74 = vector.broadcast %73 : vector<8x1xf32> to vector<8x1024xf32>
    %75 = arith.addf %72, %74 : vector<8x1024xf32>
    %c0_62 = arith.constant 0 : index
    %c0_63 = arith.constant 0 : index
    %c0_64 = arith.constant 0 : index
    %76 = vector.load %arg5[%c0_62, %c0_63, %c0_64] : memref<1x8x1024xf32, #tpu.memory_space<vmem>>, vector<1x8x1024xf32>
    %77 = vector.shape_cast %76 : vector<1x8x1024xf32> to vector<8x1024xf32>
    %78 = vector.shape_cast %75 : vector<8x1024xf32> to vector<1x8x1024xf32>
    tpu.vector_store %arg5[%c0_62, %c0_63, %c0_64], %78 {strides = array<i32>} : memref<1x8x1024xf32, #tpu.memory_space<vmem>>, vector<1x8x1024xf32>,
    %cst_65 = arith.constant dense<0.000000e+00> : vector<8xf32>
    %79 = vector.multi_reduction <add>, %75, %cst_65 [1] : vector<8x1024xf32> to vector<8xf32>
    %80 = vector.shape_cast %79 : vector<8xf32> to vector<8x1xf32>
    %cst_66 = arith.constant 9.765625E-4 : f32
    %81 = vector.broadcast %cst_66 : f32 to vector<8x1xf32>
    %82 = arith.mulf %80, %81 : vector<8x1xf32>
    %83 = vector.broadcast %82 : vector<8x1xf32> to vector<8x1024xf32>
    %84 = arith.subf %75, %83 : vector<8x1024xf32>
    %85 = arith.mulf %84, %84 : vector<8x1024xf32>
    %cst_67 = arith.constant dense<0.000000e+00> : vector<8xf32>
    %86 = vector.multi_reduction <add>, %85, %cst_67 [1] : vector<8x1024xf32> to vector<8xf32>
    %87 = vector.shape_cast %86 : vector<8xf32> to vector<8x1xf32>
    %c0_68 = arith.constant 0 : index
    %c0_69 = arith.constant 0 : index
    %c0_70 = arith.constant 0 : index
    %88 = vector.load %arg6[%c0_68, %c0_69, %c0_70] : memref<1x8x1xf32, #tpu.memory_space<vmem>>, vector<1x8x1xf32>
    %89 = vector.shape_cast %88 : vector<1x8x1xf32> to vector<8x1xf32>
    %90 = vector.shape_cast %80 : vector<8x1xf32> to vector<1x8x1xf32>
    tpu.vector_store %arg6[%c0_68, %c0_69, %c0_70], %90 {strides = array<i32>} : memref<1x8x1xf32, #tpu.memory_space<vmem>>, vector<1x8x1xf32>,
    %c0_71 = arith.constant 0 : index
    %c0_72 = arith.constant 0 : index
    %c0_73 = arith.constant 0 : index
    %91 = vector.load %arg7[%c0_71, %c0_72, %c0_73] : memref<1x8x1xf32, #tpu.memory_space<vmem>>, vector<1x8x1xf32>
    %92 = vector.shape_cast %91 : vector<1x8x1xf32> to vector<8x1xf32>
    %93 = vector.shape_cast %87 : vector<8x1xf32> to vector<1x8x1xf32>
    tpu.vector_store %arg7[%c0_71, %c0_72, %c0_73], %93 {strides = array<i32>} : memref<1x8x1xf32, #tpu.memory_space<vmem>>, vector<1x8x1xf32>,
    return
  }
  func.func @transform_0(%arg0: i32) -> (i32, i32, i32) {
    %c0_i32 = arith.constant 0 : i32
    %c0_i32_0 = arith.constant 0 : i32
    %c0_i32_1 = arith.constant 0 : i32
    return %arg0, %c0_i32, %c0_i32_0 : i32, i32, i32
  }
  func.func @transform_1(%arg0: i32) -> (i32, i32, i32) {
    %c0_i32 = arith.constant 0 : i32
    %c0_i32_0 = arith.constant 0 : i32
    %c0_i32_1 = arith.constant 0 : i32
    %c0_i32_2 = arith.constant 0 : i32
    return %c0_i32, %c0_i32_0, %c0_i32_1 : i32, i32, i32
  }
  func.func @transform_2(%arg0: i32) -> (i32, i32) {
    %c0_i32 = arith.constant 0 : i32
    %c0_i32_0 = arith.constant 0 : i32
    %c0_i32_1 = arith.constant 0 : i32
    return %c0_i32, %c0_i32_0 : i32, i32
  }
  func.func @transform_3(%arg0: i32) -> (i32, i32) {
    %c0_i32 = arith.constant 0 : i32
    %c0_i32_0 = arith.constant 0 : i32
    %c0_i32_1 = arith.constant 0 : i32
    return %c0_i32, %c0_i32_0 : i32, i32
  }
  func.func @transform_4(%arg0: i32) -> (i32, i32, i32) {
    %c0_i32 = arith.constant 0 : i32
    %c0_i32_0 = arith.constant 0 : i32
    %c0_i32_1 = arith.constant 0 : i32
    return %arg0, %c0_i32, %c0_i32_0 : i32, i32, i32
  }
  func.func @transform_5(%arg0: i32) -> (i32, i32, i32) {
    %c0_i32 = arith.constant 0 : i32
    %c0_i32_0 = arith.constant 0 : i32
    %c0_i32_1 = arith.constant 0 : i32
    return %arg0, %c0_i32, %c0_i32_0 : i32, i32, i32
  }
  func.func @transform_6(%arg0: i32) -> (i32, i32, i32) {
    %c0_i32 = arith.constant 0 : i32
    %c0_i32_0 = arith.constant 0 : i32
    %c0_i32_1 = arith.constant 0 : i32
    return %arg0, %c0_i32, %c0_i32_0 : i32, i32, i32
  }
}

</mosaic_0001>

<llo_original>
// kernel: tpu_custom_call.1
$region0: #{tpu_custom_call.1}
  #allocation0 [shape = 'u32[]', space=smem, size = 0x4, offset = 0x4, fixed_abs, tag = 'smem constant byte address 0x4 - core index']
  #allocation1 [shape = 'u32[144,128]{1,0:T(1,128)}', space=vmem, size = 0x12000, scoped, tag = 'internal scratch']
  %s0 = inlined_call_operand.vmem [shape: bf16[2,4,1090], index: 0, kind: input, shape index: {}]
  %s1 = inlined_call_operand.vmem [shape: bf16[9,8,4], index: 1, kind: input, shape index: {}]
  %s2 = inlined_call_operand.vmem [shape: f32[3,1024], index: 2, kind: input, shape index: {}]
  %s3 = inlined_call_operand.vmem [shape: f32[8,1], index: 3, kind: input, shape index: {}]
  %s4 = inlined_call_operand.hbm [shape: f32[2,8,1024], index: 4, kind: output, shape index: {0}]
  %s5 = inlined_call_operand.vmem [shape: f32[2,8,1], index: 5, kind: output, shape index: {1}]
  %s6 = inlined_call_operand.vmem [shape: f32[2,8,1], index: 6, kind: output, shape index: {2}]
  %7 = xla_tuple %s4, %s5, %s6
  %s8 = sld [smem:[#allocation0]]
  $region65: #{tpu_custom_call.1} parent=0
    _
  %s10 = ssub.s32 1, %s8
  %s11 = scalar_select 0, %s10, %s8
  $region1: #{tpu_custom_call.1} parent=0
    #allocation2 [shape = 'u8[65536]{0}', space=vmem, size = 0x10000, scoped, tag = 'output window, operand 0']
    #allocation3 [shape = 's32[2]{0}', space=sflag, size = 0x8, scoped, tag = 'scoped memory for tpu_custom_call.1']
    %12 = vsyncpa [#allocation3], 0
    %s13 = scalar_lea.sflag [#allocation3], 1
    %14 = vsyncpa %s13, 0
    loop: start=0, step=1, limit=4
    $region2: #{tpu_custom_call.1} parent=1 // loop_pre_header
      _
    $region3: #{tpu_custom_call.1} parent=1 // loop_header
      %s16 = sphi 0, %s20
      %p17 = scmp.ge.s32.totalorder %s16, 4
      %s26 = sphi 0, %s28
      %s29 = sphi 0, %s26
      %s30 = sphi 0, %s29
      %s46 = sphi 0, %s30
      %s50 = sphi 0, %s50
      %s52 = sphi 0, %s50
      %s53 = sphi 0, %s52
      %s67 = sphi 0, %s53
      %s71 = sphi 0, %s71
      %s73 = sphi 0, %s71
      %s74 = sphi 0, %s73
      %s88 = sphi 0, %s74
      %s92 = sphi 0, %s92
      %s94 = sphi 0, %s92
      %s95 = sphi 0, %s94
      %s109 = sphi 0, %s95
      %s115 = sphi 0, %s117
      %s118 = sphi 0, %s115
      %s119 = sphi 0, %s118
      %s135 = sphi 0, %s119
      %s141 = sphi 0, %s143
      %s144 = sphi 0, %s141
      %s145 = sphi 0, %s144
      %s161 = sphi 0, %s145
      %s167 = sphi 0, %s169
      %s170 = sphi 0, %s167
      %s171 = sphi 0, %s170
      %s187 = sphi 0, %s171
    $region4: #{tpu_custom_call.1} parent=1 // loop_header_branch
      %19 = sbr.rel (%p17) target = $region8
    $region5: #{tpu_custom_call.1} parent=1 // loop_body
      %s21 = ssub.s32 %s16, 1
      %s22 = ssub.s32 %s16, 2
      %s23 = sadd.s32 %s16, 1
      %s24 = ssub.s32 %s16, %s23
      %p25 = scmp.eq.s32.totalorder %s24, 0
      %s27 = sadd.s32 %s26, 1
      %s28 = scalar_select %p25, %s26, %s27
      %p31 = pneg %p25
      %p32 = scmp.eq.s32.totalorder %s16, 1
      %p33 = por %p31, %p32
      %p34 = scmp.ne.s32.totalorder %s26, %s29
      %p35 = scmp.eq.s32.totalorder %s16, 0
      %p36 = por %p34, %p35
      %p37 = scmp.ne.s32.totalorder %s26, %s29
      %p38 = scmp.eq.s32.totalorder %s21, 1
      %p39 = por %p37, %p38
      %p40 = scmp.ne.s32.totalorder %s29, %s30
      %p41 = scmp.eq.s32.totalorder %s21, 0
      %p42 = por %p40, %p41
      %p43 = scmp.ne.s32.totalorder %s29, %s30
      %p44 = scmp.eq.s32.totalorder %s22, 1
      %p45 = por %p43, %p44
      %p47 = scmp.ne.s32.totalorder %s30, %s46
      %p48 = scmp.eq.s32.totalorder %s22, 0
      %p49 = por %p47, %p48
      %s51 = sadd.s32 %s50, 1
      %p54 = scmp.eq.s32.totalorder %s16, 1
      %p55 = scmp.ne.s32.totalorder %s50, %s52
      %p56 = scmp.eq.s32.totalorder %s16, 0
      %p57 = por %p55, %p56
      %p58 = scmp.ne.s32.totalorder %s50, %s52
      %p59 = scmp.eq.s32.totalorder %s21, 1
      %p60 = por %p58, %p59
      %p61 = scmp.ne.s32.totalorder %s52, %s53
      %p62 = scmp.eq.s32.totalorder %s21, 0
      %p63 = por %p61, %p62
      %p64 = scmp.ne.s32.totalorder %s52, %s53
      %p65 = scmp.eq.s32.totalorder %s22, 1
      %p66 = por %p64, %p65
      %p68 = scmp.ne.s32.totalorder %s53, %s67
      %p69 = scmp.eq.s32.totalorder %s22, 0
      %p70 = por %p68, %p69
      %s72 = sadd.s32 %s71, 1
      %p75 = scmp.eq.s32.totalorder %s16, 1
      %p76 = scmp.ne.s32.totalorder %s71, %s73
      %p77 = scmp.eq.s32.totalorder %s16, 0
      %p78 = por %p76, %p77
      %p79 = scmp.ne.s32.totalorder %s71, %s73
      %p80 = scmp.eq.s32.totalorder %s21, 1
      %p81 = por %p79, %p80
      %p82 = scmp.ne.s32.totalorder %s73, %s74
      %p83 = scmp.eq.s32.totalorder %s21, 0
      %p84 = por %p82, %p83
      %p85 = scmp.ne.s32.totalorder %s73, %s74
      %p86 = scmp.eq.s32.totalorder %s22, 1
      %p87 = por %p85, %p86
      %p89 = scmp.ne.s32.totalorder %s74, %s88
      %p90 = scmp.eq.s32.totalorder %s22, 0
      %p91 = por %p89, %p90
      %s93 = sadd.s32 %s92, 1
      %p96 = scmp.eq.s32.totalorder %s16, 1
      %p97 = scmp.ne.s32.totalorder %s92, %s94
      %p98 = scmp.eq.s32.totalorder %s16, 0
      %p99 = por %p97, %p98
      %p100 = scmp.ne.s32.totalorder %s92, %s94
      %p101 = scmp.eq.s32.totalorder %s21, 1
      %p102 = por %p100, %p101
      %p103 = scmp.ne.s32.totalorder %s94, %s95
      %p104 = scmp.eq.s32.totalorder %s21, 0
      %p105 = por %p103, %p104
      %p106 = scmp.ne.s32.totalorder %s94, %s95
      %p107 = scmp.eq.s32.totalorder %s22, 1
      %p108 = por %p106, %p107
      %p110 = scmp.ne.s32.totalorder %s95, %s109
      %p111 = scmp.eq.s32.totalorder %s22, 0
      %p112 = por %p110, %p111
      %s113 = ssub.s32 %s16, %s23
      %p114 = scmp.eq.s32.totalorder %s113, 0
      %s116 = sadd.s32 %s115, 1
      %s117 = scalar_select %p114, %s115, %s116
      %p120 = pneg %p114
      %p121 = scmp.eq.s32.totalorder %s16, 1
      %p122 = por %p120, %p121
      %p123 = scmp.ne.s32.totalorder %s115, %s118
      %p124 = scmp.eq.s32.totalorder %s16, 0
      %p125 = por %p123, %p124
      %p126 = scmp.ne.s32.totalorder %s115, %s118
      %p127 = scmp.eq.s32.totalorder %s21, 1
      %p128 = por %p126, %p127
      %p129 = scmp.ne.s32.totalorder %s118, %s119
      %p130 = scmp.eq.s32.totalorder %s21, 0
      %p131 = por %p129, %p130
      %p132 = scmp.ne.s32.totalorder %s118, %s119
      %p133 = scmp.eq.s32.totalorder %s22, 1
      %p134 = por %p132, %p133
      %p136 = scmp.ne.s32.totalorder %s119, %s135
      %p137 = scmp.eq.s32.totalorder %s22, 0
      %p138 = por %p136, %p137
      %s139 = ssub.s32 %s16, %s23
      %p140 = scmp.eq.s32.totalorder %s139, 0
      %s142 = sadd.s32 %s141, 1
      %s143 = scalar_select %p140, %s141, %s142
      %p146 = pneg %p140
      %p147 = scmp.eq.s32.totalorder %s16, 1
      %p148 = por %p146, %p147
      %p149 = scmp.ne.s32.totalorder %s141, %s144
      %p150 = scmp.eq.s32.totalorder %s16, 0
      %p151 = por %p149, %p150
      %p152 = scmp.ne.s32.totalorder %s141, %s144
      %p153 = scmp.eq.s32.totalorder %s21, 1
      %p154 = por %p152, %p153
      %p155 = scmp.ne.s32.totalorder %s144, %s145
      %p156 = scmp.eq.s32.totalorder %s21, 0
      %p157 = por %p155, %p156
      %p158 = scmp.ne.s32.totalorder %s144, %s145
      %p159 = scmp.eq.s32.totalorder %s22, 1
      %p160 = por %p158, %p159
      %p162 = scmp.ne.s32.totalorder %s145, %s161
      %p163 = scmp.eq.s32.totalorder %s22, 0
      %p164 = por %p162, %p163
      %s165 = ssub.s32 %s16, %s23
      %p166 = scmp.eq.s32.totalorder %s165, 0
      %s168 = sadd.s32 %s167, 1
      %s169 = scalar_select %p166, %s167, %s168
      %p172 = pneg %p166
      %p173 = scmp.eq.s32.totalorder %s16, 1
      %p174 = por %p172, %p173
      %p175 = scmp.ne.s32.totalorder %s167, %s170
      %p176 = scmp.eq.s32.totalorder %s16, 0
      %p177 = por %p175, %p176
      %p178 = scmp.ne.s32.totalorder %s167, %s170
      %p179 = scmp.eq.s32.totalorder %s21, 1
      %p180 = por %p178, %p179
      %p181 = scmp.ne.s32.totalorder %s170, %s171
      %p182 = scmp.eq.s32.totalorder %s21, 0
      %p183 = por %p181, %p182
      %p184 = scmp.ne.s32.totalorder %s170, %s171
      %p185 = scmp.eq.s32.totalorder %s22, 1
      %p186 = por %p184, %p185
      %p188 = scmp.ne.s32.totalorder %s171, %s187
      %p189 = scmp.eq.s32.totalorder %s22, 0
      %p190 = por %p188, %p189
      %p191 = scmp.le.s32.totalorder 1, %s16
      %p192 = scmp.lt.s32.totalorder %s16, 3
      %p193 = pnand %p191, %p192
      %p194 = pneg %p193
      // Predicated region
      $region9: #{tpu_custom_call.1} parent=5 // pred_check
        _
      $region10: #{tpu_custom_call.1} parent=5 // pred_check_branch
        %196 = sbr.rel (%p193) target = $region12
      $region11: #{tpu_custom_call.1} parent=5 // pred_region
        %s197 = ssub.s32 %s16, 1
        // Predicated region
        $region13: #{tpu_custom_call.1} parent=11 // pred_check
          %p198 = pneg %p63
        $region14: #{tpu_custom_call.1} parent=11 // pred_check_branch
          %200 = sbr.rel (%p198) target = $region16
        $region15: #{tpu_custom_call.1} parent=11 // pred_region
          _
        $region16: #{tpu_custom_call.1} parent=11 // pred_fallthru
          _
        // Predicated region
        $region17: #{tpu_custom_call.1} parent=11 // pred_check
          %p201 = pneg %p84
        $region18: #{tpu_custom_call.1} parent=11 // pred_check_branch
          %203 = sbr.rel (%p201) target = $region20
        $region19: #{tpu_custom_call.1} parent=11 // pred_region
          _
        $region20: #{tpu_custom_call.1} parent=11 // pred_fallthru
          _
        // Predicated region
        $region21: #{tpu_custom_call.1} parent=11 // pred_check
          %p204 = pneg %p105
        $region22: #{tpu_custom_call.1} parent=11 // pred_check_branch
          %206 = sbr.rel (%p204) target = $region24
        $region23: #{tpu_custom_call.1} parent=11 // pred_region
          _
        $region24: #{tpu_custom_call.1} parent=11 // pred_fallthru
          _
      $region12: #{tpu_custom_call.1} parent=5 // pred_fallthru
        _
      %p207 = scmp.lt.s32.totalorder %s16, 2
      // Predicated region
      $region25: #{tpu_custom_call.1} parent=5 // pred_check
        %p208 = pneg %p207
      $region26: #{tpu_custom_call.1} parent=5 // pred_check_branch
        %210 = sbr.rel (%p208) target = $region28
      $region27: #{tpu_custom_call.1} parent=5 // pred_region
        // Predicated region
        $region29: #{tpu_custom_call.1} parent=27 // pred_check
          %p211 = pneg %p36
        $region30: #{tpu_custom_call.1} parent=27 // pred_check_branch
          %213 = sbr.rel (%p211) target = $region32
        $region31: #{tpu_custom_call.1} parent=27 // pred_region
          %p214 = scmp.lt.s32.totalorder %s16, 1
          %s215 = scalar_select %p214, %s16, 1
          %s216 = smul.addr %s215, 9
          %s217 = smul.addr %s216, 2
          %s218 = scalar_lea.vmem %s0, %s217
        $region32: #{tpu_custom_call.1} parent=27 // pred_fallthru
          _
      $region28: #{tpu_custom_call.1} parent=5 // pred_fallthru
        _
      %p219 = scmp.le.s32.totalorder 1, %s16
      %p220 = scmp.lt.s32.totalorder %s16, 3
      %p221 = pnand %p219, %p220
      %p222 = pneg %p221
      // Predicated region
      $region33: #{tpu_custom_call.1} parent=5 // pred_check
        _
      $region34: #{tpu_custom_call.1} parent=5 // pred_check_branch
        %224 = sbr.rel (%p221) target = $region36
      $region35: #{tpu_custom_call.1} parent=5 // pred_region
        %s225 = ssub.s32 %s16, 1
        %p226 = scmp.lt.s32.totalorder %s21, 1
        %s227 = scalar_select %p226, %s21, 1
        %s228 = smul.addr %s227, 9
        %s229 = smul.addr %s228, 2
        %s230 = scalar_lea.vmem %s0, %s229
        %p231 = pneg %p42
        %p232 = pneg %p39
        %p233 = pneg %p63
        %p234 = pneg %p60
        %p235 = pneg %p84
        %p236 = pneg %p81
        %p237 = pneg %p105
        %p238 = pneg %p102
        %p239 = pneg %p131
        %p240 = pneg %p128
        %s241 = sand.u32 %s118, 1
        %s242 = scalar_lea.sflag [#allocation3], %s241
        %s243 = sand.u32 %s118, 1
        %s244 = smul.addr %s243, 64
        %s245 = scalar_lea.vmem [#allocation2], %s244
        %p246 = pneg %p157
        %p247 = pneg %p154
        %p248 = scmp.lt.s32.totalorder %s21, 1
        %s249 = scalar_select %p248, %s21, 1
        %s250 = smul.addr %s249, 8
        %s251 = scalar_lea.vmem %s5, %s250
        %p252 = pneg %p183
        %p253 = pneg %p180
        %p254 = scmp.lt.s32.totalorder %s21, 1
        %s255 = scalar_select %p254, %s21, 1
        %s256 = smul.addr %s255, 8
        %s257 = scalar_lea.vmem %s6, %s256
        %p258 = scmp.lt.s32.totalorder %s21, 1
        %s259 = scalar_select %p258, %s21, 1
        %s260 = smul.addr %s259, 9
        %s261 = smul.addr %s260, 2
        %s262 = scalar_lea.vmem %s0, %s261
        %p263 = scmp.lt.s32.totalorder %s21, 1
        %s264 = scalar_select %p263, %s21, 1
        %s265 = smul.addr %s264, 8
        %s266 = scalar_lea.vmem %s5, %s265
        %p267 = scmp.lt.s32.totalorder %s21, 1
        %s268 = scalar_select %p267, %s21, 1
        %s269 = smul.addr %s268, 8
        %s270 = scalar_lea.vmem %s6, %s269
        %v272 = vld [vmem:[%s262] sm:$0xff]
        %v273 = vld [vmem:[%s262 + $0x8] sm:$0xff]
        %v274 = vld [vmem:[%s1] sm:$0xf]
        %v277 = vcombine.high %v272, %v272
        %v279 = vunpack.c.l.s4 1983009808
        %v280 = vunpack.c.0.s8 %v279
        %v281 = vlaneseq
        %v282 = vshrl.u32 %v281, 7
        %v283 = vsub.s32 %v280, %v282
        %v284 = vrot.slane %v272, %v283
        %v286 = vunpack.c.l.s4 1983009808
        %v287 = vunpack.c.0.s8 %v286
        %v288 = vlaneseq
        %v289 = vshrl.u32 %v288, 7
        %v290 = vsub.s32 %v287, %v289
        %v291 = vrot.slane %v277, %v290
        %v292 = vcombine.high %v284, %v284
        %v293 = vcombine.high %v291, %v291
        %v294 = vcombine.high %v273, %v273
        %v296 = vunpack.c.l.s4 1983009808
        %v297 = vunpack.c.0.s8 %v296
        %v298 = vlaneseq
        %v299 = vshrl.u32 %v298, 7
        %v300 = vsub.s32 %v297, %v299
        %v301 = vrot.slane %v273, %v300
        %v303 = vunpack.c.l.s4 1983009808
        %v304 = vunpack.c.0.s8 %v303
        %v305 = vlaneseq
        %v306 = vshrl.u32 %v305, 7
        %v307 = vsub.s32 %v304, %v306
        %v308 = vrot.slane %v294, %v307
        %v309 = vcombine.high %v301, %v301
        %v310 = vcombine.high %v308, %v308
        %vm311 = vcmask 31744
        %v313 = vsel %vm311, %v274, 0
        %vm315 = vcmask 1041408
        %v317 = vsel %vm315, %v284, 0
        %v320 = vsel %vm315, %v292, 0
        %v323 = vsel %vm315, %v291, 0
        %v326 = vsel %vm315, %v293, 0
        %v329 = vsel %vm315, %v301, 0
        %v332 = vsel %vm315, %v309, 0
        %v335 = vsel %vm315, %v308, 0
        %v338 = vsel %vm315, %v310, 0
        %340 = vmatprep.subr.bf16.mxu0 %v320
        %341 = vmatpush1.bf16.msra.mxu0 %v317
        %342 = vmatprep.subr.bf16.mxu0 0
        %343 = vmatpush1.bf16.msra.mxu0 0
        %344 = vmatprep.subr.bf16.mxu0 0
        %345 = vmatpush1.bf16.msra.mxu0 0
        %346 = vmatprep.subr.bf16.mxu0 0
        %347 = vmatpush1.bf16.msra.mxu0 0
        %348 = vmatprep.subr.bf16.mxu0 0
        %349 = vmatpush1.bf16.msra.mxu0 0
        %350 = vmatprep.subr.bf16.mxu0 0
        %351 = vmatpush1.bf16.msra.mxu0 0
        %352 = vmatprep.subr.bf16.mxu0 0
        %353 = vmatpush1.bf16.msra.mxu0 0
        %354 = vmatprep.subr.bf16.mxu0 0
        %355 = vmatpush1.bf16.msra.mxu0 0
        %356 = vmatprep.subr.bf16.mxu0 0
        %357 = vmatpush1.bf16.msra.mxu0 0
        %358 = vmatprep.subr.bf16.mxu0 0
        %359 = vmatpush1.bf16.msra.mxu0 0
        %360 = vmatprep.subr.bf16.mxu0 0
        %361 = vmatpush1.bf16.msra.mxu0 0
        %362 = vmatprep.subr.bf16.mxu0 0
        %363 = vmatpush1.bf16.msra.mxu0 0
        %364 = vmatprep.subr.bf16.mxu0 0
        %365 = vmatpush1.bf16.msra.mxu0 0
        %366 = vmatprep.subr.bf16.mxu0 0
        %367 = vmatpush1.bf16.msra.mxu0 0
        %368 = vmatprep.subr.bf16.mxu0 0
        %369 = vmatpush1.bf16.msra.mxu0 0
        %370 = vmatprep.subr.bf16.mxu0 0
        %371 = vmatpush1.bf16.msra.mxu0 0
        %372 = vmatprep.mubr.bf16.mxu0 0
        %373 = vmatmul.mubr.bf16.gmra.mrb[0].mxu0 %v313
        %v374 = vpop.f32.mrb[0].mxu0
        %v375 = vadd.f32 0.0, %v374
        %v376 = vpop.f32.mrb[0].mxu0
        %v377 = vadd.f32 0.0, %v376
        %v378 = vpop.f32.mrb[0].mxu0
        %v379 = vpop.f32.mrb[0].mxu0
        %380 = vdwg.mxu0
        %381 = vmatprep.subr.bf16.mxu0 %v326
        %382 = vmatpush1.bf16.msra.mxu0 %v323
        %383 = vmatprep.subr.bf16.mxu0 0
        %384 = vmatpush1.bf16.msra.mxu0 0
        %385 = vmatprep.subr.bf16.mxu0 0
        %386 = vmatpush1.bf16.msra.mxu0 0
        %387 = vmatprep.subr.bf16.mxu0 0
        %388 = vmatpush1.bf16.msra.mxu0 0
        %389 = vmatprep.subr.bf16.mxu0 0
        %390 = vmatpush1.bf16.msra.mxu0 0
        %391 = vmatprep.subr.bf16.mxu0 0
        %392 = vmatpush1.bf16.msra.mxu0 0
        %393 = vmatprep.subr.bf16.mxu0 0
        %394 = vmatpush1.bf16.msra.mxu0 0
        %395 = vmatprep.subr.bf16.mxu0 0
        %396 = vmatpush1.bf16.msra.mxu0 0
        %397 = vmatprep.subr.bf16.mxu0 0
        %398 = vmatpush1.bf16.msra.mxu0 0
        %399 = vmatprep.subr.bf16.mxu0 0
        %400 = vmatpush1.bf16.msra.mxu0 0
        %401 = vmatprep.subr.bf16.mxu0 0
        %402 = vmatpush1.bf16.msra.mxu0 0
        %403 = vmatprep.subr.bf16.mxu0 0
        %404 = vmatpush1.bf16.msra.mxu0 0
        %405 = vmatprep.subr.bf16.mxu0 0
        %406 = vmatpush1.bf16.msra.mxu0 0
        %407 = vmatprep.subr.bf16.mxu0 0
        %408 = vmatpush1.bf16.msra.mxu0 0
        %409 = vmatprep.subr.bf16.mxu0 0
        %410 = vmatpush1.bf16.msra.mxu0 0
        %411 = vmatprep.subr.bf16.mxu0 0
        %412 = vmatpush1.bf16.msra.mxu0 0
        %413 = vmatprep.mubr.bf16.mxu0 0
        %414 = vmatmul.mubr.bf16.gmra.mrb[0].mxu0 %v313
        %v415 = vpop.f32.mrb[0].mxu0
        %v416 = vadd.f32 0.0, %v415
        %v417 = vpop.f32.mrb[0].mxu0
        %v418 = vadd.f32 0.0, %v417
        %v419 = vpop.f32.mrb[0].mxu0
        %v420 = vpop.f32.mrb[0].mxu0
        %421 = vdwg.mxu0
        %422 = vmatprep.subr.bf16.mxu0 %v332
        %423 = vmatpush1.bf16.msra.mxu0 %v329
        %424 = vmatprep.subr.bf16.mxu0 0
        %425 = vmatpush1.bf16.msra.mxu0 0
        %426 = vmatprep.subr.bf16.mxu0 0
        %427 = vmatpush1.bf16.msra.mxu0 0
        %428 = vmatprep.subr.bf16.mxu0 0
        %429 = vmatpush1.bf16.msra.mxu0 0
        %430 = vmatprep.subr.bf16.mxu0 0
        %431 = vmatpush1.bf16.msra.mxu0 0
        %432 = vmatprep.subr.bf16.mxu0 0
        %433 = vmatpush1.bf16.msra.mxu0 0
        %434 = vmatprep.subr.bf16.mxu0 0
        %435 = vmatpush1.bf16.msra.mxu0 0
        %436 = vmatprep.subr.bf16.mxu0 0
        %437 = vmatpush1.bf16.msra.mxu0 0
        %438 = vmatprep.subr.bf16.mxu0 0
        %439 = vmatpush1.bf16.msra.mxu0 0
        %440 = vmatprep.subr.bf16.mxu0 0
        %441 = vmatpush1.bf16.msra.mxu0 0
        %442 = vmatprep.subr.bf16.mxu0 0
        %443 = vmatpush1.bf16.msra.mxu0 0
        %444 = vmatprep.subr.bf16.mxu0 0
        %445 = vmatpush1.bf16.msra.mxu0 0
        %446 = vmatprep.subr.bf16.mxu0 0
        %447 = vmatpush1.bf16.msra.mxu0 0
        %448 = vmatprep.subr.bf16.mxu0 0
        %449 = vmatpush1.bf16.msra.mxu0 0
        %450 = vmatprep.subr.bf16.mxu0 0
        %451 = vmatpush1.bf16.msra.mxu0 0
        %452 = vmatprep.subr.bf16.mxu0 0
        %453 = vmatpush1.bf16.msra.mxu0 0
        %454 = vmatprep.mubr.bf16.mxu0 0
        %455 = vmatmul.mubr.bf16.gmra.mrb[0].mxu0 %v313
        %v456 = vpop.f32.mrb[0].mxu0
        %v457 = vadd.f32 0.0, %v456
        %v458 = vpop.f32.mrb[0].mxu0
        %v459 = vadd.f32 0.0, %v458
        %v460 = vpop.f32.mrb[0].mxu0
        %v461 = vpop.f32.mrb[0].mxu0
        %462 = vdwg.mxu0
        %463 = vmatprep.subr.bf16.mxu0 %v338
        %464 = vmatpush1.bf16.msra.mxu0 %v335
        %465 = vmatprep.subr.bf16.mxu0 0
        %466 = vmatpush1.bf16.msra.mxu0 0
        %467 = vmatprep.subr.bf16.mxu0 0
        %468 = vmatpush1.bf16.msra.mxu0 0
        %469 = vmatprep.subr.bf16.mxu0 0
        %470 = vmatpush1.bf16.msra.mxu0 0
        %471 = vmatprep.subr.bf16.mxu0 0
        %472 = vmatpush1.bf16.msra.mxu0 0
        %473 = vmatprep.subr.bf16.mxu0 0
        %474 = vmatpush1.bf16.msra.mxu0 0
        %475 = vmatprep.subr.bf16.mxu0 0
        %476 = vmatpush1.bf16.msra.mxu0 0
        %477 = vmatprep.subr.bf16.mxu0 0
        %478 = vmatpush1.bf16.msra.mxu0 0
        %479 = vmatprep.subr.bf16.mxu0 0
        %480 = vmatpush1.bf16.msra.mxu0 0
        %481 = vmatprep.subr.bf16.mxu0 0
        %482 = vmatpush1.bf16.msra.mxu0 0
        %483 = vmatprep.subr.bf16.mxu0 0
        %484 = vmatpush1.bf16.msra.mxu0 0
        %485 = vmatprep.subr.bf16.mxu0 0
        %486 = vmatpush1.bf16.msra.mxu0 0
        %487 = vmatprep.subr.bf16.mxu0 0
        %488 = vmatpush1.bf16.msra.mxu0 0
        %489 = vmatprep.subr.bf16.mxu0 0
        %490 = vmatpush1.bf16.msra.mxu0 0
        %491 = vmatprep.subr.bf16.mxu0 0
        %492 = vmatpush1.bf16.msra.mxu0 0
        %493 = vmatprep.subr.bf16.mxu0 0
        %494 = vmatpush1.bf16.msra.mxu0 0
        %495 = vmatprep.mubr.bf16.mxu0 0
        %496 = vmatmul.mubr.bf16.gmra.mrb[0].mxu0 %v313
        %v497 = vpop.f32.mrb[0].mxu0
        %v498 = vadd.f32 0.0, %v497
        %v499 = vpop.f32.mrb[0].mxu0
        %v500 = vadd.f32 0.0, %v499
        %v501 = vpop.f32.mrb[0].mxu0
        %v502 = vpop.f32.mrb[0].mxu0
        %503 = vdwg.mxu0
        %v504 = vld [vmem:[%s2] ss:$4 sm:$0xff]
        %v506 = vlaneseq
        %v507 = vshrl.u32 %v506, 7
        %v508 = vsub.s32 0, %v507
        %v509 = vrot.slane %v504, %v508
        %v510 = vlaneseq
        %v511 = vshrl.u32 %v510, 7
        %v512 = vsub.s32 1, %v511
        %v513 = vrot.slane %v504, %v512
        %v514 = vlaneseq
        %v515 = vshrl.u32 %v514, 7
        %v516 = vsub.s32 2, %v515
        %v517 = vrot.slane %v504, %v516
        %v518 = vlaneseq
        %v519 = vshrl.u32 %v518, 7
        %v520 = vsub.s32 3, %v519
        %v521 = vrot.slane %v504, %v520
        %v522 = vlaneseq
        %v523 = vshrl.u32 %v522, 7
        %v524 = vsub.s32 4, %v523
        %v525 = vrot.slane %v504, %v524
        %v526 = vlaneseq
        %v527 = vshrl.u32 %v526, 7
        %v528 = vsub.s32 5, %v527
        %v529 = vrot.slane %v504, %v528
        %v530 = vlaneseq
        %v531 = vshrl.u32 %v530, 7
        %v532 = vsub.s32 6, %v531
        %v533 = vrot.slane %v504, %v532
        %v534 = vlaneseq
        %v535 = vshrl.u32 %v534, 7
        %v536 = vsub.s32 7, %v535
        %v537 = vrot.slane %v504, %v536
        %v546 = vmul.f32 %v375, %v509
        %v547 = vmul.f32 %v377, %v513
        %v548 = vmul.f32 %v416, %v517
        %v549 = vmul.f32 %v418, %v521
        %v550 = vmul.f32 %v457, %v525
        %v551 = vmul.f32 %v459, %v529
        %v552 = vmul.f32 %v498, %v533
        %v553 = vmul.f32 %v500, %v537
        %v554 = vadd.f32 %v546, 0.0
        %v555 = vadd.f32 %v547, 0.0
        %v556 = vadd.f32 %v548, 0.0
        %v557 = vadd.f32 %v549, 0.0
        %v558 = vadd.f32 %v550, 0.0
        %v559 = vadd.f32 %v551, 0.0
        %v560 = vadd.f32 %v552, 0.0
        %v561 = vadd.f32 %v553, 0.0
        %v562 = vld [vmem:[%s262] sm:$0xff]
        %v563 = vld [vmem:[%s262 + $0x8] sm:$0xff]
        %v564 = vld [vmem:[%s262 + $0x10] sm:$0x3]
        %s565 = scalar_lea.vmem %s1, 4
        %v566 = vld [vmem:[%s565] sm:$0xf]
        %v570 = vcombine.high %v562, %v562
        %v572 = vunpack.c.l.s4 1983009808
        %v573 = vunpack.c.0.s8 %v572
        %v574 = vlaneseq
        %v575 = vshrl.u32 %v574, 7
        %v576 = vsub.s32 %v573, %v575
        %v577 = vrot.slane %v562, %v576
        %v579 = vunpack.c.l.s4 1983009808
        %v580 = vunpack.c.0.s8 %v579
        %v581 = vlaneseq
        %v582 = vshrl.u32 %v581, 7
        %v583 = vsub.s32 %v580, %v582
        %v584 = vrot.slane %v570, %v583
        %v585 = vcombine.high %v577, %v577
        %v586 = vcombine.high %v584, %v584
        %v587 = vcombine.high %v563, %v563
        %v589 = vunpack.c.l.s4 1983009808
        %v590 = vunpack.c.0.s8 %v589
        %v591 = vlaneseq
        %v592 = vshrl.u32 %v591, 7
        %v593 = vsub.s32 %v590, %v592
        %v594 = vrot.slane %v563, %v593
        %v596 = vunpack.c.l.s4 1983009808
        %v597 = vunpack.c.0.s8 %v596
        %v598 = vlaneseq
        %v599 = vshrl.u32 %v598, 7
        %v600 = vsub.s32 %v597, %v599
        %v601 = vrot.slane %v587, %v600
        %v602 = vcombine.high %v594, %v594
        %v603 = vcombine.high %v601, %v601
        %v605 = vunpack.c.l.s4 1983009808
        %v606 = vunpack.c.0.s8 %v605
        %v607 = vlaneseq
        %v608 = vshrl.u32 %v607, 7
        %v609 = vsub.s32 %v606, %v608
        %v610 = vrot.slane %v564, %v609
        %611 = vrot.lane.b32.xlu0 %v577, 127
        %v612 = vpop.permute.xlu0 %611
        %613 = vrot.lane.b32.xlu0 %v585, 127
        %v614 = vpop.permute.xlu0 %613
        %615 = vrot.lane.b32.xlu0 %v584, 127
        %v616 = vpop.permute.xlu0 %615
        %617 = vrot.lane.b32.xlu0 %v586, 127
        %v618 = vpop.permute.xlu0 %617
        %619 = vrot.lane.b32.xlu0 %v594, 127
        %v620 = vpop.permute.xlu0 %619
        %621 = vrot.lane.b32.xlu0 %v602, 127
        %v622 = vpop.permute.xlu0 %621
        %623 = vrot.lane.b32.xlu0 %v601, 127
        %v624 = vpop.permute.xlu0 %623
        %625 = vrot.lane.b32.xlu0 %v603, 127
        %v626 = vpop.permute.xlu0 %625
        %627 = vrot.lane.b32.xlu0 %v610, 127
        %v628 = vpop.permute.xlu0 %627
        %vm629 = vcmask 1039360
        %v630 = vsel %vm629, %v612, %v614
        %v631 = vsel %vm629, %v614, %v616
        %v632 = vsel %vm629, %v616, %v618
        %v633 = vsel %vm629, %v618, %v620
        %v634 = vsel %vm629, %v620, %v622
        %v635 = vsel %vm629, %v622, %v624
        %v636 = vsel %vm629, %v624, %v626
        %v637 = vsel %vm629, %v626, %v628
        %v639 = vsel %vm311, %v566, 0
        %v642 = vsel %vm315, %v630, 0
        %v645 = vsel %vm315, %v631, 0
        %v648 = vsel %vm315, %v632, 0
        %v651 = vsel %vm315, %v633, 0
        %v654 = vsel %vm315, %v634, 0
        %v657 = vsel %vm315, %v635, 0
        %v660 = vsel %vm315, %v636, 0
        %v663 = vsel %vm315, %v637, 0
        %665 = vmatprep.subr.bf16.mxu0 %v645
        %666 = vmatpush1.bf16.msra.mxu0 %v642
        %667 = vmatprep.subr.bf16.mxu0 0
        %668 = vmatpush1.bf16.msra.mxu0 0
        %669 = vmatprep.subr.bf16.mxu0 0
        %670 = vmatpush1.bf16.msra.mxu0 0
        %671 = vmatprep.subr.bf16.mxu0 0
        %672 = vmatpush1.bf16.msra.mxu0 0
        %673 = vmatprep.subr.bf16.mxu0 0
        %674 = vmatpush1.bf16.msra.mxu0 0
        %675 = vmatprep.subr.bf16.mxu0 0
        %676 = vmatpush1.bf16.msra.mxu0 0
        %677 = vmatprep.subr.bf16.mxu0 0
        %678 = vmatpush1.bf16.msra.mxu0 0
        %679 = vmatprep.subr.bf16.mxu0 0
        %680 = vmatpush1.bf16.msra.mxu0 0
        %681 = vmatprep.subr.bf16.mxu0 0
        %682 = vmatpush1.bf16.msra.mxu0 0
        %683 = vmatprep.subr.bf16.mxu0 0
        %684 = vmatpush1.bf16.msra.mxu0 0
        %685 = vmatprep.subr.bf16.mxu0 0
        %686 = vmatpush1.bf16.msra.mxu0 0
        %687 = vmatprep.subr.bf16.mxu0 0
        %688 = vmatpush1.bf16.msra.mxu0 0
        %689 = vmatprep.subr.bf16.mxu0 0
        %690 = vmatpush1.bf16.msra.mxu0 0
        %691 = vmatprep.subr.bf16.mxu0 0
        %692 = vmatpush1.bf16.msra.mxu0 0
        %693 = vmatprep.subr.bf16.mxu0 0
        %694 = vmatpush1.bf16.msra.mxu0 0
        %695 = vmatprep.subr.bf16.mxu0 0
        %696 = vmatpush1.bf16.msra.mxu0 0
        %697 = vmatprep.mubr.bf16.mxu0 0
        %698 = vmatmul.mubr.bf16.gmra.mrb[0].mxu0 %v639
        %v699 = vpop.f32.mrb[0].mxu0
        %v700 = vadd.f32 0.0, %v699
        %v701 = vpop.f32.mrb[0].mxu0
        %v702 = vadd.f32 0.0, %v701
        %v703 = vpop.f32.mrb[0].mxu0
        %v704 = vpop.f32.mrb[0].mxu0
        %705 = vdwg.mxu0
        %706 = vmatprep.subr.bf16.mxu0 %v651
        %707 = vmatpush1.bf16.msra.mxu0 %v648
        %708 = vmatprep.subr.bf16.mxu0 0
        %709 = vmatpush1.bf16.msra.mxu0 0
        %710 = vmatprep.subr.bf16.mxu0 0
        %711 = vmatpush1.bf16.msra.mxu0 0
        %712 = vmatprep.subr.bf16.mxu0 0
        %713 = vmatpush1.bf16.msra.mxu0 0
        %714 = vmatprep.subr.bf16.mxu0 0
        %715 = vmatpush1.bf16.msra.mxu0 0
        %716 = vmatprep.subr.bf16.mxu0 0
        %717 = vmatpush1.bf16.msra.mxu0 0
        %718 = vmatprep.subr.bf16.mxu0 0
        %719 = vmatpush1.bf16.msra.mxu0 0
        %720 = vmatprep.subr.bf16.mxu0 0
        %721 = vmatpush1.bf16.msra.mxu0 0
        %722 = vmatprep.subr.bf16.mxu0 0
        %723 = vmatpush1.bf16.msra.mxu0 0
        %724 = vmatprep.subr.bf16.mxu0 0
        %725 = vmatpush1.bf16.msra.mxu0 0
        %726 = vmatprep.subr.bf16.mxu0 0
        %727 = vmatpush1.bf16.msra.mxu0 0
        %728 = vmatprep.subr.bf16.mxu0 0
        %729 = vmatpush1.bf16.msra.mxu0 0
        %730 = vmatprep.subr.bf16.mxu0 0
        %731 = vmatpush1.bf16.msra.mxu0 0
        %732 = vmatprep.subr.bf16.mxu0 0
        %733 = vmatpush1.bf16.msra.mxu0 0
        %734 = vmatprep.subr.bf16.mxu0 0
        %735 = vmatpush1.bf16.msra.mxu0 0
        %736 = vmatprep.subr.bf16.mxu0 0
        %737 = vmatpush1.bf16.msra.mxu0 0
        %738 = vmatprep.mubr.bf16.mxu0 0
        %739 = vmatmul.mubr.bf16.gmra.mrb[0].mxu0 %v639
        %v740 = vpop.f32.mrb[0].mxu0
        %v741 = vadd.f32 0.0, %v740
        %v742 = vpop.f32.mrb[0].mxu0
        %v743 = vadd.f32 0.0, %v742
        %v744 = vpop.f32.mrb[0].mxu0
        %v745 = vpop.f32.mrb[0].mxu0
        %746 = vdwg.mxu0
        %747 = vmatprep.subr.bf16.mxu0 %v657
        %748 = vmatpush1.bf16.msra.mxu0 %v654
        %749 = vmatprep.subr.bf16.mxu0 0
        %750 = vmatpush1.bf16.msra.mxu0 0
        %751 = vmatprep.subr.bf16.mxu0 0
        %752 = vmatpush1.bf16.msra.mxu0 0
        %753 = vmatprep.subr.bf16.mxu0 0
        %754 = vmatpush1.bf16.msra.mxu0 0
        %755 = vmatprep.subr.bf16.mxu0 0
        %756 = vmatpush1.bf16.msra.mxu0 0
        %757 = vmatprep.subr.bf16.mxu0 0
        %758 = vmatpush1.bf16.msra.mxu0 0
        %759 = vmatprep.subr.bf16.mxu0 0
        %760 = vmatpush1.bf16.msra.mxu0 0
        %761 = vmatprep.subr.bf16.mxu0 0
        %762 = vmatpush1.bf16.msra.mxu0 0
        %763 = vmatprep.subr.bf16.mxu0 0
        %764 = vmatpush1.bf16.msra.mxu0 0
        %765 = vmatprep.subr.bf16.mxu0 0
        %766 = vmatpush1.bf16.msra.mxu0 0
        %767 = vmatprep.subr.bf16.mxu0 0
        %768 = vmatpush1.bf16.msra.mxu0 0
        %769 = vmatprep.subr.bf16.mxu0 0
        %770 = vmatpush1.bf16.msra.mxu0 0
        %771 = vmatprep.subr.bf16.mxu0 0
        %772 = vmatpush1.bf16.msra.mxu0 0
        %773 = vmatprep.subr.bf16.mxu0 0
        %774 = vmatpush1.bf16.msra.mxu0 0
        %775 = vmatprep.subr.bf16.mxu0 0
        %776 = vmatpush1.bf16.msra.mxu0 0
        %777 = vmatprep.subr.bf16.mxu0 0
        %778 = vmatpush1.bf16.msra.mxu0 0
        %779 = vmatprep.mubr.bf16.mxu0 0
        %780 = vmatmul.mubr.bf16.gmra.mrb[0].mxu0 %v639
        %v781 = vpop.f32.mrb[0].mxu0
        %v782 = vadd.f32 0.0, %v781
        %v783 = vpop.f32.mrb[0].mxu0
        %v784 = vadd.f32 0.0, %v783
        %v785 = vpop.f32.mrb[0].mxu0
        %v786 = vpop.f32.mrb[0].mxu0
        %787 = vdwg.mxu0
        %788 = vmatprep.subr.bf16.mxu0 %v663
        %789 = vmatpush1.bf16.msra.mxu0 %v660
        %790 = vmatprep.subr.bf16.mxu0 0
        %791 = vmatpush1.bf16.msra.mxu0 0
        %792 = vmatprep.subr.bf16.mxu0 0
        %793 = vmatpush1.bf16.msra.mxu0 0
        %794 = vmatprep.subr.bf16.mxu0 0
        %795 = vmatpush1.bf16.msra.mxu0 0
        %796 = vmatprep.subr.bf16.mxu0 0
        %797 = vmatpush1.bf16.msra.mxu0 0
        %798 = vmatprep.subr.bf16.mxu0 0
        %799 = vmatpush1.bf16.msra.mxu0 0
        %800 = vmatprep.subr.bf16.mxu0 0
        %801 = vmatpush1.bf16.msra.mxu0 0
        %802 = vmatprep.subr.bf16.mxu0 0
        %803 = vmatpush1.bf16.msra.mxu0 0
        %804 = vmatprep.subr.bf16.mxu0 0
        %805 = vmatpush1.bf16.msra.mxu0 0
        %806 = vmatprep.subr.bf16.mxu0 0
        %807 = vmatpush1.bf16.msra.mxu0 0
        %808 = vmatprep.subr.bf16.mxu0 0
        %809 = vmatpush1.bf16.msra.mxu0 0
        %810 = vmatprep.subr.bf16.mxu0 0
        %811 = vmatpush1.bf16.msra.mxu0 0
        %812 = vmatprep.subr.bf16.mxu0 0
        %813 = vmatpush1.bf16.msra.mxu0 0
        %814 = vmatprep.subr.bf16.mxu0 0
        %815 = vmatpush1.bf16.msra.mxu0 0
        %816 = vmatprep.subr.bf16.mxu0 0
        %817 = vmatpush1.bf16.msra.mxu0 0
        %818 = vmatprep.subr.bf16.mxu0 0
        %819 = vmatpush1.bf16.msra.mxu0 0
        %820 = vmatprep.mubr.bf16.mxu0 0
        %821 = vmatmul.mubr.bf16.gmra.mrb[0].mxu0 %v639
        %v822 = vpop.f32.mrb[0].mxu0
        %v823 = vadd.f32 0.0, %v822
        %v824 = vpop.f32.mrb[0].mxu0
        %v825 = vadd.f32 0.0, %v824
        %v826 = vpop.f32.mrb[0].mxu0
        %v827 = vpop.f32.mrb[0].mxu0
        %828 = vdwg.mxu0
        %v829 = vadd.f32 %v554, %v700
        %v830 = vadd.f32 %v555, %v702
        %v831 = vadd.f32 %v556, %v741
        %v832 = vadd.f32 %v557, %v743
        %v833 = vadd.f32 %v558, %v782
        %v834 = vadd.f32 %v559, %v784
        %v835 = vadd.f32 %v560, %v823
        %v836 = vadd.f32 %v561, %v825
        %v837 = vld [vmem:[%s262] sm:$0xff]
        %v838 = vld [vmem:[%s262 + $0x8] sm:$0xff]
        %v839 = vld [vmem:[%s262 + $0x10] sm:$0x3]
        %s840 = scalar_lea.vmem %s1, 8
        %v841 = vld [vmem:[%s840] sm:$0xf]
        %v845 = vcombine.high %v837, %v837
        %v847 = vunpack.c.l.s4 1983009808
        %v848 = vunpack.c.0.s8 %v847
        %v849 = vlaneseq
        %v850 = vshrl.u32 %v849, 7
        %v851 = vsub.s32 %v848, %v850
        %v852 = vrot.slane %v837, %v851
        %v854 = vunpack.c.l.s4 1983009808
        %v855 = vunpack.c.0.s8 %v854
        %v856 = vlaneseq
        %v857 = vshrl.u32 %v856, 7
        %v858 = vsub.s32 %v855, %v857
        %v859 = vrot.slane %v845, %v858
        %v860 = vcombine.high %v852, %v852
        %v861 = vcombine.high %v859, %v859
        %v862 = vcombine.high %v838, %v838
        %v864 = vunpack.c.l.s4 1983009808
        %v865 = vunpack.c.0.s8 %v864
        %v866 = vlaneseq
        %v867 = vshrl.u32 %v866, 7
        %v868 = vsub.s32 %v865, %v867
        %v869 = vrot.slane %v838, %v868
        %v871 = vunpack.c.l.s4 1983009808
        %v872 = vunpack.c.0.s8 %v871
        %v873 = vlaneseq
        %v874 = vshrl.u32 %v873, 7
        %v875 = vsub.s32 %v872, %v874
        %v876 = vrot.slane %v862, %v875
        %v877 = vcombine.high %v869, %v869
        %v878 = vcombine.high %v876, %v876
        %v880 = vunpack.c.l.s4 1983009808
        %v881 = vunpack.c.0.s8 %v880
        %v882 = vlaneseq
        %v883 = vshrl.u32 %v882, 7
        %v884 = vsub.s32 %v881, %v883
        %v885 = vrot.slane %v839, %v884
        %886 = vrot.lane.b32.xlu0 %v852, 126
        %v887 = vpop.permute.xlu0 %886
        %888 = vrot.lane.b32.xlu0 %v860, 126
        %v889 = vpop.permute.xlu0 %888
        %890 = vrot.lane.b32.xlu0 %v859, 126
        %v891 = vpop.permute.xlu0 %890
        %892 = vrot.lane.b32.xlu0 %v861, 126
        %v893 = vpop.permute.xlu0 %892
        %894 = vrot.lane.b32.xlu0 %v869, 126
        %v895 = vpop.permute.xlu0 %894
        %896 = vrot.lane.b32.xlu0 %v877, 126
        %v897 = vpop.permute.xlu0 %896
        %898 = vrot.lane.b32.xlu0 %v876, 126
        %v899 = vpop.permute.xlu0 %898
        %900 = vrot.lane.b32.xlu0 %v878, 126
        %v901 = vpop.permute.xlu0 %900
        %902 = vrot.lane.b32.xlu0 %v885, 126
        %v903 = vpop.permute.xlu0 %902
        %vm904 = vcmask 1031168
        %v905 = vsel %vm904, %v887, %v889
        %v906 = vsel %vm904, %v889, %v891
        %v907 = vsel %vm904, %v891, %v893
        %v908 = vsel %vm904, %v893, %v895
        %v909 = vsel %vm904, %v895, %v897
        %v910 = vsel %vm904, %v897, %v899
        %v911 = vsel %vm904, %v899, %v901
        %v912 = vsel %vm904, %v901, %v903
        %v914 = vsel %vm311, %v841, 0
        %v917 = vsel %vm315, %v905, 0
        %v920 = vsel %vm315, %v906, 0
        %v923 = vsel %vm315, %v907, 0
        %v926 = vsel %vm315, %v908, 0
        %v929 = vsel %vm315, %v909, 0
        %v932 = vsel %vm315, %v910, 0
        %v935 = vsel %vm315, %v911, 0
        %v938 = vsel %vm315, %v912, 0
        %940 = vmatprep.subr.bf16.mxu0 %v920
        %941 = vmatpush1.bf16.msra.mxu0 %v917
        %942 = vmatprep.subr.bf16.mxu0 0
        %943 = vmatpush1.bf16.msra.mxu0 0
        %944 = vmatprep.subr.bf16.mxu0 0
        %945 = vmatpush1.bf16.msra.mxu0 0
        %946 = vmatprep.subr.bf16.mxu0 0
        %947 = vmatpush1.bf16.msra.mxu0 0
        %948 = vmatprep.subr.bf16.mxu0 0
        %949 = vmatpush1.bf16.msra.mxu0 0
        %950 = vmatprep.subr.bf16.mxu0 0
        %951 = vmatpush1.bf16.msra.mxu0 0
        %952 = vmatprep.subr.bf16.mxu0 0
        %953 = vmatpush1.bf16.msra.mxu0 0
        %954 = vmatprep.subr.bf16.mxu0 0
        %955 = vmatpush1.bf16.msra.mxu0 0
        %956 = vmatprep.subr.bf16.mxu0 0
        %957 = vmatpush1.bf16.msra.mxu0 0
        %958 = vmatprep.subr.bf16.mxu0 0
        %959 = vmatpush1.bf16.msra.mxu0 0
        %960 = vmatprep.subr.bf16.mxu0 0
        %961 = vmatpush1.bf16.msra.mxu0 0
        %962 = vmatprep.subr.bf16.mxu0 0
        %963 = vmatpush1.bf16.msra.mxu0 0
        %964 = vmatprep.subr.bf16.mxu0 0
        %965 = vmatpush1.bf16.msra.mxu0 0
        %966 = vmatprep.subr.bf16.mxu0 0
        %967 = vmatpush1.bf16.msra.mxu0 0
        %968 = vmatprep.subr.bf16.mxu0 0
        %969 = vmatpush1.bf16.msra.mxu0 0
        %970 = vmatprep.subr.bf16.mxu0 0
        %971 = vmatpush1.bf16.msra.mxu0 0
        %972 = vmatprep.mubr.bf16.mxu0 0
        %973 = vmatmul.mubr.bf16.gmra.mrb[0].mxu0 %v914
        %v974 = vpop.f32.mrb[0].mxu0
        %v975 = vadd.f32 0.0, %v974
        %v976 = vpop.f32.mrb[0].mxu0
        %v977 = vadd.f32 0.0, %v976
        %v978 = vpop.f32.mrb[0].mxu0
        %v979 = vpop.f32.mrb[0].mxu0
        %980 = vdwg.mxu0
        %981 = vmatprep.subr.bf16.mxu0 %v926
        %982 = vmatpush1.bf16.msra.mxu0 %v923
        %983 = vmatprep.subr.bf16.mxu0 0
        %984 = vmatpush1.bf16.msra.mxu0 0
        %985 = vmatprep.subr.bf16.mxu0 0
        %986 = vmatpush1.bf16.msra.mxu0 0
        %987 = vmatprep.subr.bf16.mxu0 0
        %988 = vmatpush1.bf16.msra.mxu0 0
        %989 = vmatprep.subr.bf16.mxu0 0
        %990 = vmatpush1.bf16.msra.mxu0 0
        %991 = vmatprep.subr.bf16.mxu0 0
        %992 = vmatpush1.bf16.msra.mxu0 0
        %993 = vmatprep.subr.bf16.mxu0 0
        %994 = vmatpush1.bf16.msra.mxu0 0
        %995 = vmatprep.subr.bf16.mxu0 0
        %996 = vmatpush1.bf16.msra.mxu0 0
        %997 = vmatprep.subr.bf16.mxu0 0
        %998 = vmatpush1.bf16.msra.mxu0 0
        %999 = vmatprep.subr.bf16.mxu0 0
        %1000 = vmatpush1.bf16.msra.mxu0 0
        %1001 = vmatprep.subr.bf16.mxu0 0
        %1002 = vmatpush1.bf16.msra.mxu0 0
        %1003 = vmatprep.subr.bf16.mxu0 0
        %1004 = vmatpush1.bf16.msra.mxu0 0
        %1005 = vmatprep.subr.bf16.mxu0 0
        %1006 = vmatpush1.bf16.msra.mxu0 0
        %1007 = vmatprep.subr.bf16.mxu0 0
        %1008 = vmatpush1.bf16.msra.mxu0 0
        %1009 = vmatprep.subr.bf16.mxu0 0
        %1010 = vmatpush1.bf16.msra.mxu0 0
        %1011 = vmatprep.subr.bf16.mxu0 0
        %1012 = vmatpush1.bf16.msra.mxu0 0
        %1013 = vmatprep.mubr.bf16.mxu0 0
        %1014 = vmatmul.mubr.bf16.gmra.mrb[0].mxu0 %v914
        %v1015 = vpop.f32.mrb[0].mxu0
        %v1016 = vadd.f32 0.0, %v1015
        %v1017 = vpop.f32.mrb[0].mxu0
        %v1018 = vadd.f32 0.0, %v1017
        %v1019 = vpop.f32.mrb[0].mxu0
        %v1020 = vpop.f32.mrb[0].mxu0
        %1021 = vdwg.mxu0
        %1022 = vmatprep.subr.bf16.mxu0 %v932
        %1023 = vmatpush1.bf16.msra.mxu0 %v929
        %1024 = vmatprep.subr.bf16.mxu0 0
        %1025 = vmatpush1.bf16.msra.mxu0 0
        %1026 = vmatprep.subr.bf16.mxu0 0
        %1027 = vmatpush1.bf16.msra.mxu0 0
        %1028 = vmatprep.subr.bf16.mxu0 0
        %1029 = vmatpush1.bf16.msra.mxu0 0
        %1030 = vmatprep.subr.bf16.mxu0 0
        %1031 = vmatpush1.bf16.msra.mxu0 0
        %1032 = vmatprep.subr.bf16.mxu0 0
        %1033 = vmatpush1.bf16.msra.mxu0 0
        %1034 = vmatprep.subr.bf16.mxu0 0
        %1035 = vmatpush1.bf16.msra.mxu0 0
        %1036 = vmatprep.subr.bf16.mxu0 0
        %1037 = vmatpush1.bf16.msra.mxu0 0
        %1038 = vmatprep.subr.bf16.mxu0 0
        %1039 = vmatpush1.bf16.msra.mxu0 0
        %1040 = vmatprep.subr.bf16.mxu0 0
        %1041 = vmatpush1.bf16.msra.mxu0 0
        %1042 = vmatprep.subr.bf16.mxu0 0
        %1043 = vmatpush1.bf16.msra.mxu0 0
        %1044 = vmatprep.subr.bf16.mxu0 0
        %1045 = vmatpush1.bf16.msra.mxu0 0
        %1046 = vmatprep.subr.bf16.mxu0 0
        %1047 = vmatpush1.bf16.msra.mxu0 0
        %1048 = vmatprep.subr.bf16.mxu0 0
        %1049 = vmatpush1.bf16.msra.mxu0 0
        %1050 = vmatprep.subr.bf16.mxu0 0
        %1051 = vmatpush1.bf16.msra.mxu0 0
        %1052 = vmatprep.subr.bf16.mxu0 0
        %1053 = vmatpush1.bf16.msra.mxu0 0
        %1054 = vmatprep.mubr.bf16.mxu0 0
        %1055 = vmatmul.mubr.bf16.gmra.mrb[0].mxu0 %v914
        %v1056 = vpop.f32.mrb[0].mxu0
        %v1057 = vadd.f32 0.0, %v1056
        %v1058 = vpop.f32.mrb[0].mxu0
        %v1059 = vadd.f32 0.0, %v1058
        %v1060 = vpop.f32.mrb[0].mxu0
        %v1061 = vpop.f32.mrb[0].mxu0
        %1062 = vdwg.mxu0
        %1063 = vmatprep.subr.bf16.mxu0 %v938
        %1064 = vmatpush1.bf16.msra.mxu0 %v935
        %1065 = vmatprep.subr.bf16.mxu0 0
        %1066 = vmatpush1.bf16.msra.mxu0 0
        %1067 = vmatprep.subr.bf16.mxu0 0
        %1068 = vmatpush1.bf16.msra.mxu0 0
        %1069 = vmatprep.subr.bf16.mxu0 0
        %1070 = vmatpush1.bf16.msra.mxu0 0
        %1071 = vmatprep.subr.bf16.mxu0 0
        %1072 = vmatpush1.bf16.msra.mxu0 0
        %1073 = vmatprep.subr.bf16.mxu0 0
        %1074 = vmatpush1.bf16.msra.mxu0 0
        %1075 = vmatprep.subr.bf16.mxu0 0
        %1076 = vmatpush1.bf16.msra.mxu0 0
        %1077 = vmatprep.subr.bf16.mxu0 0
        %1078 = vmatpush1.bf16.msra.mxu0 0
        %1079 = vmatprep.subr.bf16.mxu0 0
        %1080 = vmatpush1.bf16.msra.mxu0 0
        %1081 = vmatprep.subr.bf16.mxu0 0
        %1082 = vmatpush1.bf16.msra.mxu0 0
        %1083 = vmatprep.subr.bf16.mxu0 0
        %1084 = vmatpush1.bf16.msra.mxu0 0
        %1085 = vmatprep.subr.bf16.mxu0 0
        %1086 = vmatpush1.bf16.msra.mxu0 0
        %1087 = vmatprep.subr.bf16.mxu0 0
        %1088 = vmatpush1.bf16.msra.mxu0 0
        %1089 = vmatprep.subr.bf16.mxu0 0
        %1090 = vmatpush1.bf16.msra.mxu0 0
        %1091 = vmatprep.subr.bf16.mxu0 0
        %1092 = vmatpush1.bf16.msra.mxu0 0
        %1093 = vmatprep.subr.bf16.mxu0 0
        %1094 = vmatpush1.bf16.msra.mxu0 0
        %1095 = vmatprep.mubr.bf16.mxu0 0
        %1096 = vmatmul.mubr.bf16.gmra.mrb[0].mxu0 %v914
        %v1097 = vpop.f32.mrb[0].mxu0
        %v1098 = vadd.f32 0.0, %v1097
        %v1099 = vpop.f32.mrb[0].mxu0
        %v1100 = vadd.f32 0.0, %v1099
        %v1101 = vpop.f32.mrb[0].mxu0
        %v1102 = vpop.f32.mrb[0].mxu0
        %1103 = vdwg.mxu0
        %s1104 = scalar_lea.vmem %s2, 2
        %v1105 = vld [vmem:[%s1104] ss:$4 sm:$0xff]
        %v1107 = vlaneseq
        %v1108 = vshrl.u32 %v1107, 7
        %v1109 = vsub.s32 0, %v1108
        %v1110 = vrot.slane %v1105, %v1109
        %v1111 = vlaneseq
        %v1112 = vshrl.u32 %v1111, 7
        %v1113 = vsub.s32 1, %v1112
        %v1114 = vrot.slane %v1105, %v1113
        %v1115 = vlaneseq
        %v1116 = vshrl.u32 %v1115, 7
        %v1117 = vsub.s32 2, %v1116
        %v1118 = vrot.slane %v1105, %v1117
        %v1119 = vlaneseq
        %v1120 = vshrl.u32 %v1119, 7
        %v1121 = vsub.s32 3, %v1120
        %v1122 = vrot.slane %v1105, %v1121
        %v1123 = vlaneseq
        %v1124 = vshrl.u32 %v1123, 7
        %v1125 = vsub.s32 4, %v1124
        %v1126 = vrot.slane %v1105, %v1125
        %v1127 = vlaneseq
        %v1128 = vshrl.u32 %v1127, 7
        %v1129 = vsub.s32 5, %v1128
        %v1130 = vrot.slane %v1105, %v1129
        %v1131 = vlaneseq
        %v1132 = vshrl.u32 %v1131, 7
        %v1133 = vsub.s32 6, %v1132
        %v1134 = vrot.slane %v1105, %v1133
        %v1135 = vlaneseq
        %v1136 = vshrl.u32 %v1135, 7
        %v1137 = vsub.s32 7, %v1136
        %v1138 = vrot.slane %v1105, %v1137
        %v1147 = vmul.f32 %v975, %v1110
        %v1148 = vmul.f32 %v977, %v1114
        %v1149 = vmul.f32 %v1016, %v1118
        %v1150 = vmul.f32 %v1018, %v1122
        %v1151 = vmul.f32 %v1057, %v1126
        %v1152 = vmul.f32 %v1059, %v1130
        %v1153 = vmul.f32 %v1098, %v1134
        %v1154 = vmul.f32 %v1100, %v1138
        %v1155 = vadd.f32 %v829, %v1147
        %v1156 = vadd.f32 %v830, %v1148
        %v1157 = vadd.f32 %v831, %v1149
        %v1158 = vadd.f32 %v832, %v1150
        %v1159 = vadd.f32 %v833, %v1151
        %v1160 = vadd.f32 %v834, %v1152
        %v1161 = vadd.f32 %v835, %v1153
        %v1162 = vadd.f32 %v836, %v1154
        %v1163 = vld [vmem:[%s262] sm:$0xff]
        %v1164 = vld [vmem:[%s262 + $0x8] sm:$0xff]
        %v1165 = vld [vmem:[%s262 + $0x10] sm:$0x3]
        %s1166 = scalar_lea.vmem %s1, 12
        %v1167 = vld [vmem:[%s1166] sm:$0xf]
        %v1171 = vcombine.high %v1163, %v1163
        %v1173 = vunpack.c.l.s4 1983009808
        %v1174 = vunpack.c.0.s8 %v1173
        %v1175 = vlaneseq
        %v1176 = vshrl.u32 %v1175, 7
        %v1177 = vsub.s32 %v1174, %v1176
        %v1178 = vrot.slane %v1163, %v1177
        %v1180 = vunpack.c.l.s4 1983009808
        %v1181 = vunpack.c.0.s8 %v1180
        %v1182 = vlaneseq
        %v1183 = vshrl.u32 %v1182, 7
        %v1184 = vsub.s32 %v1181, %v1183
        %v1185 = vrot.slane %v1171, %v1184
        %v1186 = vcombine.high %v1178, %v1178
        %v1187 = vcombine.high %v1185, %v1185
        %v1188 = vcombine.high %v1164, %v1164
        %v1190 = vunpack.c.l.s4 1983009808
        %v1191 = vunpack.c.0.s8 %v1190
        %v1192 = vlaneseq
        %v1193 = vshrl.u32 %v1192, 7
        %v1194 = vsub.s32 %v1191, %v1193
        %v1195 = vrot.slane %v1164, %v1194
        %v1197 = vunpack.c.l.s4 1983009808
        %v1198 = vunpack.c.0.s8 %v1197
        %v1199 = vlaneseq
        %v1200 = vshrl.u32 %v1199, 7
        %v1201 = vsub.s32 %v1198, %v1200
        %v1202 = vrot.slane %v1188, %v1201
        %v1203 = vcombine.high %v1195, %v1195
        %v1204 = vcombine.high %v1202, %v1202
        %v1206 = vunpack.c.l.s4 1983009808
        %v1207 = vunpack.c.0.s8 %v1206
        %v1208 = vlaneseq
        %v1209 = vshrl.u32 %v1208, 7
        %v1210 = vsub.s32 %v1207, %v1209
        %v1211 = vrot.slane %v1165, %v1210
        %1212 = vrot.lane.b32.xlu0 %v1178, 96
        %v1213 = vpop.permute.xlu0 %1212
        %1214 = vrot.lane.b32.xlu0 %v1186, 96
        %v1215 = vpop.permute.xlu0 %1214
        %1216 = vrot.lane.b32.xlu0 %v1185, 96
        %v1217 = vpop.permute.xlu0 %1216
        %1218 = vrot.lane.b32.xlu0 %v1187, 96
        %v1219 = vpop.permute.xlu0 %1218
        %1220 = vrot.lane.b32.xlu0 %v1195, 96
        %v1221 = vpop.permute.xlu0 %1220
        %1222 = vrot.lane.b32.xlu0 %v1203, 96
        %v1223 = vpop.permute.xlu0 %1222
        %1224 = vrot.lane.b32.xlu0 %v1202, 96
        %v1225 = vpop.permute.xlu0 %1224
        %1226 = vrot.lane.b32.xlu0 %v1204, 96
        %v1227 = vpop.permute.xlu0 %1226
        %1228 = vrot.lane.b32.xlu0 %v1211, 96
        %v1229 = vpop.permute.xlu0 %1228
        %vm1230 = vcmask 785408
        %v1231 = vsel %vm1230, %v1213, %v1215
        %v1232 = vsel %vm1230, %v1215, %v1217
        %v1233 = vsel %vm1230, %v1217, %v1219
        %v1234 = vsel %vm1230, %v1219, %v1221
        %v1235 = vsel %vm1230, %v1221, %v1223
        %v1236 = vsel %vm1230, %v1223, %v1225
        %v1237 = vsel %vm1230, %v1225, %v1227
        %v1238 = vsel %vm1230, %v1227, %v1229
        %v1240 = vsel %vm311, %v1167, 0
        %v1243 = vsel %vm315, %v1231, 0
        %v1246 = vsel %vm315, %v1232, 0
        %v1249 = vsel %vm315, %v1233, 0
        %v1252 = vsel %vm315, %v1234, 0
        %v1255 = vsel %vm315, %v1235, 0
        %v1258 = vsel %vm315, %v1236, 0
        %v1261 = vsel %vm315, %v1237, 0
        %v1264 = vsel %vm315, %v1238, 0
        %1266 = vmatprep.subr.bf16.mxu0 %v1246
        %1267 = vmatpush1.bf16.msra.mxu0 %v1243
        %1268 = vmatprep.subr.bf16.mxu0 0
        %1269 = vmatpush1.bf16.msra.mxu0 0
        %1270 = vmatprep.subr.bf16.mxu0 0
        %1271 = vmatpush1.bf16.msra.mxu0 0
        %1272 = vmatprep.subr.bf16.mxu0 0
        %1273 = vmatpush1.bf16.msra.mxu0 0
        %1274 = vmatprep.subr.bf16.mxu0 0
        %1275 = vmatpush1.bf16.msra.mxu0 0
        %1276 = vmatprep.subr.bf16.mxu0 0
        %1277 = vmatpush1.bf16.msra.mxu0 0
        %1278 = vmatprep.subr.bf16.mxu0 0
        %1279 = vmatpush1.bf16.msra.mxu0 0
        %1280 = vmatprep.subr.bf16.mxu0 0
        %1281 = vmatpush1.bf16.msra.mxu0 0
        %1282 = vmatprep.subr.bf16.mxu0 0
        %1283 = vmatpush1.bf16.msra.mxu0 0
        %1284 = vmatprep.subr.bf16.mxu0 0
        %1285 = vmatpush1.bf16.msra.mxu0 0
        %1286 = vmatprep.subr.bf16.mxu0 0
        %1287 = vmatpush1.bf16.msra.mxu0 0
        %1288 = vmatprep.subr.bf16.mxu0 0
        %1289 = vmatpush1.bf16.msra.mxu0 0
        %1290 = vmatprep.subr.bf16.mxu0 0
        %1291 = vmatpush1.bf16.msra.mxu0 0
        %1292 = vmatprep.subr.bf16.mxu0 0
        %1293 = vmatpush1.bf16.msra.mxu0 0
        %1294 = vmatprep.subr.bf16.mxu0 0
        %1295 = vmatpush1.bf16.msra.mxu0 0
        %1296 = vmatprep.subr.bf16.mxu0 0
        %1297 = vmatpush1.bf16.msra.mxu0 0
        %1298 = vmatprep.mubr.bf16.mxu0 0
        %1299 = vmatmul.mubr.bf16.gmra.mrb[0].mxu0 %v1240
        %v1300 = vpop.f32.mrb[0].mxu0
        %v1301 = vadd.f32 0.0, %v1300
        %v1302 = vpop.f32.mrb[0].mxu0
        %v1303 = vadd.f32 0.0, %v1302
        %v1304 = vpop.f32.mrb[0].mxu0
        %v1305 = vpop.f32.mrb[0].mxu0
        %1306 = vdwg.mxu0
        %1307 = vmatprep.subr.bf16.mxu0 %v1252
        %1308 = vmatpush1.bf16.msra.mxu0 %v1249
        %1309 = vmatprep.subr.bf16.mxu0 0
        %1310 = vmatpush1.bf16.msra.mxu0 0
        %1311 = vmatprep.subr.bf16.mxu0 0
        %1312 = vmatpush1.bf16.msra.mxu0 0
        %1313 = vmatprep.subr.bf16.mxu0 0
        %1314 = vmatpush1.bf16.msra.mxu0 0
        %1315 = vmatprep.subr.bf16.mxu0 0
        %1316 = vmatpush1.bf16.msra.mxu0 0
        %1317 = vmatprep.subr.bf16.mxu0 0
        %1318 = vmatpush1.bf16.msra.mxu0 0
        %1319 = vmatprep.subr.bf16.mxu0 0
        %1320 = vmatpush1.bf16.msra.mxu0 0
        %1321 = vmatprep.subr.bf16.mxu0 0
        %1322 = vmatpush1.bf16.msra.mxu0 0
        %1323 = vmatprep.subr.bf16.mxu0 0
        %1324 = vmatpush1.bf16.msra.mxu0 0
        %1325 = vmatprep.subr.bf16.mxu0 0
        %1326 = vmatpush1.bf16.msra.mxu0 0
        %1327 = vmatprep.subr.bf16.mxu0 0
        %1328 = vmatpush1.bf16.msra.mxu0 0
        %1329 = vmatprep.subr.bf16.mxu0 0
        %1330 = vmatpush1.bf16.msra.mxu0 0
        %1331 = vmatprep.subr.bf16.mxu0 0
        %1332 = vmatpush1.bf16.msra.mxu0 0
        %1333 = vmatprep.subr.bf16.mxu0 0
        %1334 = vmatpush1.bf16.msra.mxu0 0
        %1335 = vmatprep.subr.bf16.mxu0 0
        %1336 = vmatpush1.bf16.msra.mxu0 0
        %1337 = vmatprep.subr.bf16.mxu0 0
        %1338 = vmatpush1.bf16.msra.mxu0 0
        %1339 = vmatprep.mubr.bf16.mxu0 0
        %1340 = vmatmul.mubr.bf16.gmra.mrb[0].mxu0 %v1240
        %v1341 = vpop.f32.mrb[0].mxu0
        %v1342 = vadd.f32 0.0, %v1341
        %v1343 = vpop.f32.mrb[0].mxu0
        %v1344 = vadd.f32 0.0, %v1343
        %v1345 = vpop.f32.mrb[0].mxu0
        %v1346 = vpop.f32.mrb[0].mxu0
        %1347 = vdwg.mxu0
        %1348 = vmatprep.subr.bf16.mxu0 %v1258
        %1349 = vmatpush1.bf16.msra.mxu0 %v1255
        %1350 = vmatprep.subr.bf16.mxu0 0
        %1351 = vmatpush1.bf16.msra.mxu0 0
        %1352 = vmatprep.subr.bf16.mxu0 0
        %1353 = vmatpush1.bf16.msra.mxu0 0
        %1354 = vmatprep.subr.bf16.mxu0 0
        %1355 = vmatpush1.bf16.msra.mxu0 0
        %1356 = vmatprep.subr.bf16.mxu0 0
        %1357 = vmatpush1.bf16.msra.mxu0 0
        %1358 = vmatprep.subr.bf16.mxu0 0
        %1359 = vmatpush1.bf16.msra.mxu0 0
        %1360 = vmatprep.subr.bf16.mxu0 0
        %1361 = vmatpush1.bf16.msra.mxu0 0
        %1362 = vmatprep.subr.bf16.mxu0 0
        %1363 = vmatpush1.bf16.msra.mxu0 0
        %1364 = vmatprep.subr.bf16.mxu0 0
        %1365 = vmatpush1.bf16.msra.mxu0 0
        %1366 = vmatprep.subr.bf16.mxu0 0
        %1367 = vmatpush1.bf16.msra.mxu0 0
        %1368 = vmatprep.subr.bf16.mxu0 0
        %1369 = vmatpush1.bf16.msra.mxu0 0
        %1370 = vmatprep.subr.bf16.mxu0 0
        %1371 = vmatpush1.bf16.msra.mxu0 0
        %1372 = vmatprep.subr.bf16.mxu0 0
        %1373 = vmatpush1.bf16.msra.mxu0 0
        %1374 = vmatprep.subr.bf16.mxu0 0
        %1375 = vmatpush1.bf16.msra.mxu0 0
        %1376 = vmatprep.subr.bf16.mxu0 0
        %1377 = vmatpush1.bf16.msra.mxu0 0
        %1378 = vmatprep.subr.bf16.mxu0 0
        %1379 = vmatpush1.bf16.msra.mxu0 0
        %1380 = vmatprep.mubr.bf16.mxu0 0
        %1381 = vmatmul.mubr.bf16.gmra.mrb[0].mxu0 %v1240
        %v1382 = vpop.f32.mrb[0].mxu0
        %v1383 = vadd.f32 0.0, %v1382
        %v1384 = vpop.f32.mrb[0].mxu0
        %v1385 = vadd.f32 0.0, %v1384
        %v1386 = vpop.f32.mrb[0].mxu0
        %v1387 = vpop.f32.mrb[0].mxu0
        %1388 = vdwg.mxu0
        %1389 = vmatprep.subr.bf16.mxu0 %v1264
        %1390 = vmatpush1.bf16.msra.mxu0 %v1261
        %1391 = vmatprep.subr.bf16.mxu0 0
        %1392 = vmatpush1.bf16.msra.mxu0 0
        %1393 = vmatprep.subr.bf16.mxu0 0
        %1394 = vmatpush1.bf16.msra.mxu0 0
        %1395 = vmatprep.subr.bf16.mxu0 0
        %1396 = vmatpush1.bf16.msra.mxu0 0
        %1397 = vmatprep.subr.bf16.mxu0 0
        %1398 = vmatpush1.bf16.msra.mxu0 0
        %1399 = vmatprep.subr.bf16.mxu0 0
        %1400 = vmatpush1.bf16.msra.mxu0 0
        %1401 = vmatprep.subr.bf16.mxu0 0
        %1402 = vmatpush1.bf16.msra.mxu0 0
        %1403 = vmatprep.subr.bf16.mxu0 0
        %1404 = vmatpush1.bf16.msra.mxu0 0
        %1405 = vmatprep.subr.bf16.mxu0 0
        %1406 = vmatpush1.bf16.msra.mxu0 0
        %1407 = vmatprep.subr.bf16.mxu0 0
        %1408 = vmatpush1.bf16.msra.mxu0 0
        %1409 = vmatprep.subr.bf16.mxu0 0
        %1410 = vmatpush1.bf16.msra.mxu0 0
        %1411 = vmatprep.subr.bf16.mxu0 0
        %1412 = vmatpush1.bf16.msra.mxu0 0
        %1413 = vmatprep.subr.bf16.mxu0 0
        %1414 = vmatpush1.bf16.msra.mxu0 0
        %1415 = vmatprep.subr.bf16.mxu0 0
        %1416 = vmatpush1.bf16.msra.mxu0 0
        %1417 = vmatprep.subr.bf16.mxu0 0
        %1418 = vmatpush1.bf16.msra.mxu0 0
        %1419 = vmatprep.subr.bf16.mxu0 0
        %1420 = vmatpush1.bf16.msra.mxu0 0
        %1421 = vmatprep.mubr.bf16.mxu0 0
        %1422 = vmatmul.mubr.bf16.gmra.mrb[0].mxu0 %v1240
        %v1423 = vpop.f32.mrb[0].mxu0
        %v1424 = vadd.f32 0.0, %v1423
        %v1425 = vpop.f32.mrb[0].mxu0
        %v1426 = vadd.f32 0.0, %v1425
        %v1427 = vpop.f32.mrb[0].mxu0
        %v1428 = vpop.f32.mrb[0].mxu0
        %1429 = vdwg.mxu0
        %v1430 = vmul.f32 %v1301, %v509
        %v1431 = vmul.f32 %v1303, %v513
        %v1432 = vmul.f32 %v1342, %v517
        %v1433 = vmul.f32 %v1344, %v521
        %v1434 = vmul.f32 %v1383, %v525
        %v1435 = vmul.f32 %v1385, %v529
        %v1436 = vmul.f32 %v1424, %v533
        %v1437 = vmul.f32 %v1426, %v537
        %v1438 = vadd.f32 %v1155, %v1430
        %v1439 = vadd.f32 %v1156, %v1431
        %v1440 = vadd.f32 %v1157, %v1432
        %v1441 = vadd.f32 %v1158, %v1433
        %v1442 = vadd.f32 %v1159, %v1434
        %v1443 = vadd.f32 %v1160, %v1435
        %v1444 = vadd.f32 %v1161, %v1436
        %v1445 = vadd.f32 %v1162, %v1437
        %v1446 = vld [vmem:[%s262] sm:$0xff]
        %v1447 = vld [vmem:[%s262 + $0x8] sm:$0xff]
        %v1448 = vld [vmem:[%s262 + $0x10] sm:$0x3]
        %s1449 = scalar_lea.vmem %s1, 16
        %v1450 = vld [vmem:[%s1449] sm:$0xf]
        %v1454 = vcombine.high %v1446, %v1446
        %v1456 = vunpack.c.l.s4 1983009808
        %v1457 = vunpack.c.0.s8 %v1456
        %v1458 = vlaneseq
        %v1459 = vshrl.u32 %v1458, 7
        %v1460 = vsub.s32 %v1457, %v1459
        %v1461 = vrot.slane %v1446, %v1460
        %v1463 = vunpack.c.l.s4 1983009808
        %v1464 = vunpack.c.0.s8 %v1463
        %v1465 = vlaneseq
        %v1466 = vshrl.u32 %v1465, 7
        %v1467 = vsub.s32 %v1464, %v1466
        %v1468 = vrot.slane %v1454, %v1467
        %v1469 = vcombine.high %v1461, %v1461
        %v1470 = vcombine.high %v1468, %v1468
        %v1471 = vcombine.high %v1447, %v1447
        %v1473 = vunpack.c.l.s4 1983009808
        %v1474 = vunpack.c.0.s8 %v1473
        %v1475 = vlaneseq
        %v1476 = vshrl.u32 %v1475, 7
        %v1477 = vsub.s32 %v1474, %v1476
        %v1478 = vrot.slane %v1447, %v1477
        %v1480 = vunpack.c.l.s4 1983009808
        %v1481 = vunpack.c.0.s8 %v1480
        %v1482 = vlaneseq
        %v1483 = vshrl.u32 %v1482, 7
        %v1484 = vsub.s32 %v1481, %v1483
        %v1485 = vrot.slane %v1471, %v1484
        %v1486 = vcombine.high %v1478, %v1478
        %v1487 = vcombine.high %v1485, %v1485
        %v1489 = vunpack.c.l.s4 1983009808
        %v1490 = vunpack.c.0.s8 %v1489
        %v1491 = vlaneseq
        %v1492 = vshrl.u32 %v1491, 7
        %v1493 = vsub.s32 %v1490, %v1492
        %v1494 = vrot.slane %v1448, %v1493
        %1495 = vrot.lane.b32.xlu0 %v1461, 95
        %v1496 = vpop.permute.xlu0 %1495
        %1497 = vrot.lane.b32.xlu0 %v1469, 95
        %v1498 = vpop.permute.xlu0 %1497
        %1499 = vrot.lane.b32.xlu0 %v1468, 95
        %v1500 = vpop.permute.xlu0 %1499
        %1501 = vrot.lane.b32.xlu0 %v1470, 95
        %v1502 = vpop.permute.xlu0 %1501
        %1503 = vrot.lane.b32.xlu0 %v1478, 95
        %v1504 = vpop.permute.xlu0 %1503
        %1505 = vrot.lane.b32.xlu0 %v1486, 95
        %v1506 = vpop.permute.xlu0 %1505
        %1507 = vrot.lane.b32.xlu0 %v1485, 95
        %v1508 = vpop.permute.xlu0 %1507
        %1509 = vrot.lane.b32.xlu0 %v1487, 95
        %v1510 = vpop.permute.xlu0 %1509
        %1511 = vrot.lane.b32.xlu0 %v1494, 95
        %v1512 = vpop.permute.xlu0 %1511
        %vm1513 = vcmask 777216
        %v1514 = vsel %vm1513, %v1496, %v1498
        %v1515 = vsel %vm1513, %v1498, %v1500
        %v1516 = vsel %vm1513, %v1500, %v1502
        %v1517 = vsel %vm1513, %v1502, %v1504
        %v1518 = vsel %vm1513, %v1504, %v1506
        %v1519 = vsel %vm1513, %v1506, %v1508
        %v1520 = vsel %vm1513, %v1508, %v1510
        %v1521 = vsel %vm1513, %v1510, %v1512
        %v1523 = vsel %vm311, %v1450, 0
        %v1526 = vsel %vm315, %v1514, 0
        %v1529 = vsel %vm315, %v1515, 0
        %v1532 = vsel %vm315, %v1516, 0
        %v1535 = vsel %vm315, %v1517, 0
        %v1538 = vsel %vm315, %v1518, 0
        %v1541 = vsel %vm315, %v1519, 0
        %v1544 = vsel %vm315, %v1520, 0
        %v1547 = vsel %vm315, %v1521, 0
        %1549 = vmatprep.subr.bf16.mxu0 %v1529
        %1550 = vmatpush1.bf16.msra.mxu0 %v1526
        %1551 = vmatprep.subr.bf16.mxu0 0
        %1552 = vmatpush1.bf16.msra.mxu0 0
        %1553 = vmatprep.subr.bf16.mxu0 0
        %1554 = vmatpush1.bf16.msra.mxu0 0
        %1555 = vmatprep.subr.bf16.mxu0 0
        %1556 = vmatpush1.bf16.msra.mxu0 0
        %1557 = vmatprep.subr.bf16.mxu0 0
        %1558 = vmatpush1.bf16.msra.mxu0 0
        %1559 = vmatprep.subr.bf16.mxu0 0
        %1560 = vmatpush1.bf16.msra.mxu0 0
        %1561 = vmatprep.subr.bf16.mxu0 0
        %1562 = vmatpush1.bf16.msra.mxu0 0
        %1563 = vmatprep.subr.bf16.mxu0 0
        %1564 = vmatpush1.bf16.msra.mxu0 0
        %1565 = vmatprep.subr.bf16.mxu0 0
        %1566 = vmatpush1.bf16.msra.mxu0 0
        %1567 = vmatprep.subr.bf16.mxu0 0
        %1568 = vmatpush1.bf16.msra.mxu0 0
        %1569 = vmatprep.subr.bf16.mxu0 0
        %1570 = vmatpush1.bf16.msra.mxu0 0
        %1571 = vmatprep.subr.bf16.mxu0 0
        %1572 = vmatpush1.bf16.msra.mxu0 0
        %1573 = vmatprep.subr.bf16.mxu0 0
        %1574 = vmatpush1.bf16.msra.mxu0 0
        %1575 = vmatprep.subr.bf16.mxu0 0
        %1576 = vmatpush1.bf16.msra.mxu0 0
        %1577 = vmatprep.subr.bf16.mxu0 0
        %1578 = vmatpush1.bf16.msra.mxu0 0
        %1579 = vmatprep.subr.bf16.mxu0 0
        %1580 = vmatpush1.bf16.msra.mxu0 0
        %1581 = vmatprep.mubr.bf16.mxu0 0
        %1582 = vmatmul.mubr.bf16.gmra.mrb[0].mxu0 %v1523
        %v1583 = vpop.f32.mrb[0].mxu0
        %v1584 = vadd.f32 0.0, %v1583
        %v1585 = vpop.f32.mrb[0].mxu0
        %v1586 = vadd.f32 0.0, %v1585
        %v1587 = vpop.f32.mrb[0].mxu0
        %v1588 = vpop.f32.mrb[0].mxu0
        %1589 = vdwg.mxu0
        %1590 = vmatprep.subr.bf16.mxu0 %v1535
        %1591 = vmatpush1.bf16.msra.mxu0 %v1532
        %1592 = vmatprep.subr.bf16.mxu0 0
        %1593 = vmatpush1.bf16.msra.mxu0 0
        %1594 = vmatprep.subr.bf16.mxu0 0
        %1595 = vmatpush1.bf16.msra.mxu0 0
        %1596 = vmatprep.subr.bf16.mxu0 0
        %1597 = vmatpush1.bf16.msra.mxu0 0
        %1598 = vmatprep.subr.bf16.mxu0 0
        %1599 = vmatpush1.bf16.msra.mxu0 0
        %1600 = vmatprep.subr.bf16.mxu0 0
        %1601 = vmatpush1.bf16.msra.mxu0 0
        %1602 = vmatprep.subr.bf16.mxu0 0
        %1603 = vmatpush1.bf16.msra.mxu0 0
        %1604 = vmatprep.subr.bf16.mxu0 0
        %1605 = vmatpush1.bf16.msra.mxu0 0
        %1606 = vmatprep.subr.bf16.mxu0 0
        %1607 = vmatpush1.bf16.msra.mxu0 0
        %1608 = vmatprep.subr.bf16.mxu0 0
        %1609 = vmatpush1.bf16.msra.mxu0 0
        %1610 = vmatprep.subr.bf16.mxu0 0
        %1611 = vmatpush1.bf16.msra.mxu0 0
        %1612 = vmatprep.subr.bf16.mxu0 0
        %1613 = vmatpush1.bf16.msra.mxu0 0
        %1614 = vmatprep.subr.bf16.mxu0 0
        %1615 = vmatpush1.bf16.msra.mxu0 0
        %1616 = vmatprep.subr.bf16.mxu0 0
        %1617 = vmatpush1.bf16.msra.mxu0 0
        %1618 = vmatprep.subr.bf16.mxu0 0
        %1619 = vmatpush1.bf16.msra.mxu0 0
        %1620 = vmatprep.subr.bf16.mxu0 0
        %1621 = vmatpush1.bf16.msra.mxu0 0
        %1622 = vmatprep.mubr.bf16.mxu0 0
        %1623 = vmatmul.mubr.bf16.gmra.mrb[0].mxu0 %v1523
        %v1624 = vpop.f32.mrb[0].mxu0
        %v1625 = vadd.f32 0.0, %v1624
        %v1626 = vpop.f32.mrb[0].mxu0
        %v1627 = vadd.f32 0.0, %v1626
        %v1628 = vpop.f32.mrb[0].mxu0
        %v1629 = vpop.f32.mrb[0].mxu0
        %1630 = vdwg.mxu0
        %1631 = vmatprep.subr.bf16.mxu0 %v1541
        %1632 = vmatpush1.bf16.msra.mxu0 %v1538
        %1633 = vmatprep.subr.bf16.mxu0 0
        %1634 = vmatpush1.bf16.msra.mxu0 0
        %1635 = vmatprep.subr.bf16.mxu0 0
        %1636 = vmatpush1.bf16.msra.mxu0 0
        %1637 = vmatprep.subr.bf16.mxu0 0
        %1638 = vmatpush1.bf16.msra.mxu0 0
        %1639 = vmatprep.subr.bf16.mxu0 0
        %1640 = vmatpush1.bf16.msra.mxu0 0
        %1641 = vmatprep.subr.bf16.mxu0 0
        %1642 = vmatpush1.bf16.msra.mxu0 0
        %1643 = vmatprep.subr.bf16.mxu0 0
        %1644 = vmatpush1.bf16.msra.mxu0 0
        %1645 = vmatprep.subr.bf16.mxu0 0
        %1646 = vmatpush1.bf16.msra.mxu0 0
        %1647 = vmatprep.subr.bf16.mxu0 0
        %1648 = vmatpush1.bf16.msra.mxu0 0
        %1649 = vmatprep.subr.bf16.mxu0 0
        %1650 = vmatpush1.bf16.msra.mxu0 0
        %1651 = vmatprep.subr.bf16.mxu0 0
        %1652 = vmatpush1.bf16.msra.mxu0 0
        %1653 = vmatprep.subr.bf16.mxu0 0
        %1654 = vmatpush1.bf16.msra.mxu0 0
        %1655 = vmatprep.subr.bf16.mxu0 0
        %1656 = vmatpush1.bf16.msra.mxu0 0
        %1657 = vmatprep.subr.bf16.mxu0 0
        %1658 = vmatpush1.bf16.msra.mxu0 0
        %1659 = vmatprep.subr.bf16.mxu0 0
        %1660 = vmatpush1.bf16.msra.mxu0 0
        %1661 = vmatprep.subr.bf16.mxu0 0
        %1662 = vmatpush1.bf16.msra.mxu0 0
        %1663 = vmatprep.mubr.bf16.mxu0 0
        %1664 = vmatmul.mubr.bf16.gmra.mrb[0].mxu0 %v1523
        %v1665 = vpop.f32.mrb[0].mxu0
        %v1666 = vadd.f32 0.0, %v1665
        %v1667 = vpop.f32.mrb[0].mxu0
        %v1668 = vadd.f32 0.0, %v1667
        %v1669 = vpop.f32.mrb[0].mxu0
        %v1670 = vpop.f32.mrb[0].mxu0
        %1671 = vdwg.mxu0
        %1672 = vmatprep.subr.bf16.mxu0 %v1547
        %1673 = vmatpush1.bf16.msra.mxu0 %v1544
        %1674 = vmatprep.subr.bf16.mxu0 0
        %1675 = vmatpush1.bf16.msra.mxu0 0
        %1676 = vmatprep.subr.bf16.mxu0 0
        %1677 = vmatpush1.bf16.msra.mxu0 0
        %1678 = vmatprep.subr.bf16.mxu0 0
        %1679 = vmatpush1.bf16.msra.mxu0 0
        %1680 = vmatprep.subr.bf16.mxu0 0
        %1681 = vmatpush1.bf16.msra.mxu0 0
        %1682 = vmatprep.subr.bf16.mxu0 0
        %1683 = vmatpush1.bf16.msra.mxu0 0
        %1684 = vmatprep.subr.bf16.mxu0 0
        %1685 = vmatpush1.bf16.msra.mxu0 0
        %1686 = vmatprep.subr.bf16.mxu0 0
        %1687 = vmatpush1.bf16.msra.mxu0 0
        %1688 = vmatprep.subr.bf16.mxu0 0
        %1689 = vmatpush1.bf16.msra.mxu0 0
        %1690 = vmatprep.subr.bf16.mxu0 0
        %1691 = vmatpush1.bf16.msra.mxu0 0
        %1692 = vmatprep.subr.bf16.mxu0 0
        %1693 = vmatpush1.bf16.msra.mxu0 0
        %1694 = vmatprep.subr.bf16.mxu0 0
        %1695 = vmatpush1.bf16.msra.mxu0 0
        %1696 = vmatprep.subr.bf16.mxu0 0
        %1697 = vmatpush1.bf16.msra.mxu0 0
        %1698 = vmatprep.subr.bf16.mxu0 0
        %1699 = vmatpush1.bf16.msra.mxu0 0
        %1700 = vmatprep.subr.bf16.mxu0 0
        %1701 = vmatpush1.bf16.msra.mxu0 0
        %1702 = vmatprep.subr.bf16.mxu0 0
        %1703 = vmatpush1.bf16.msra.mxu0 0
        %1704 = vmatprep.mubr.bf16.mxu0 0
        %1705 = vmatmul.mubr.bf16.gmra.mrb[0].mxu0 %v1523
        %v1706 = vpop.f32.mrb[0].mxu0
        %v1707 = vadd.f32 0.0, %v1706
        %v1708 = vpop.f32.mrb[0].mxu0
        %v1709 = vadd.f32 0.0, %v1708
        %v1710 = vpop.f32.mrb[0].mxu0
        %v1711 = vpop.f32.mrb[0].mxu0
        %1712 = vdwg.mxu0
        %v1713 = vadd.f32 %v1438, %v1584
        %v1714 = vadd.f32 %v1439, %v1586
        %v1715 = vadd.f32 %v1440, %v1625
        %v1716 = vadd.f32 %v1441, %v1627
        %v1717 = vadd.f32 %v1442, %v1666
        %v1718 = vadd.f32 %v1443, %v1668
        %v1719 = vadd.f32 %v1444, %v1707
        %v1720 = vadd.f32 %v1445, %v1709
        %v1721 = vld [vmem:[%s262] sm:$0xff]
        %v1722 = vld [vmem:[%s262 + $0x8] sm:$0xff]
        %v1723 = vld [vmem:[%s262 + $0x10] sm:$0x3]
        %s1724 = scalar_lea.vmem %s1, 20
        %v1725 = vld [vmem:[%s1724] sm:$0xf]
        %v1729 = vcombine.high %v1721, %v1721
        %v1731 = vunpack.c.l.s4 1983009808
        %v1732 = vunpack.c.0.s8 %v1731
        %v1733 = vlaneseq
        %v1734 = vshrl.u32 %v1733, 7
        %v1735 = vsub.s32 %v1732, %v1734
        %v1736 = vrot.slane %v1721, %v1735
        %v1738 = vunpack.c.l.s4 1983009808
        %v1739 = vunpack.c.0.s8 %v1738
        %v1740 = vlaneseq
        %v1741 = vshrl.u32 %v1740, 7
        %v1742 = vsub.s32 %v1739, %v1741
        %v1743 = vrot.slane %v1729, %v1742
        %v1744 = vcombine.high %v1736, %v1736
        %v1745 = vcombine.high %v1743, %v1743
        %v1746 = vcombine.high %v1722, %v1722
        %v1748 = vunpack.c.l.s4 1983009808
        %v1749 = vunpack.c.0.s8 %v1748
        %v1750 = vlaneseq
        %v1751 = vshrl.u32 %v1750, 7
        %v1752 = vsub.s32 %v1749, %v1751
        %v1753 = vrot.slane %v1722, %v1752
        %v1755 = vunpack.c.l.s4 1983009808
        %v1756 = vunpack.c.0.s8 %v1755
        %v1757 = vlaneseq
        %v1758 = vshrl.u32 %v1757, 7
        %v1759 = vsub.s32 %v1756, %v1758
        %v1760 = vrot.slane %v1746, %v1759
        %v1761 = vcombine.high %v1753, %v1753
        %v1762 = vcombine.high %v1760, %v1760
        %v1764 = vunpack.c.l.s4 1983009808
        %v1765 = vunpack.c.0.s8 %v1764
        %v1766 = vlaneseq
        %v1767 = vshrl.u32 %v1766, 7
        %v1768 = vsub.s32 %v1765, %v1767
        %v1769 = vrot.slane %v1723, %v1768
        %1770 = vrot.lane.b32.xlu0 %v1736, 94
        %v1771 = vpop.permute.xlu0 %1770
        %1772 = vrot.lane.b32.xlu0 %v1744, 94
        %v1773 = vpop.permute.xlu0 %1772
        %1774 = vrot.lane.b32.xlu0 %v1743, 94
        %v1775 = vpop.permute.xlu0 %1774
        %1776 = vrot.lane.b32.xlu0 %v1745, 94
        %v1777 = vpop.permute.xlu0 %1776
        %1778 = vrot.lane.b32.xlu0 %v1753, 94
        %v1779 = vpop.permute.xlu0 %1778
        %1780 = vrot.lane.b32.xlu0 %v1761, 94
        %v1781 = vpop.permute.xlu0 %1780
        %1782 = vrot.lane.b32.xlu0 %v1760, 94
        %v1783 = vpop.permute.xlu0 %1782
        %1784 = vrot.lane.b32.xlu0 %v1762, 94
        %v1785 = vpop.permute.xlu0 %1784
        %1786 = vrot.lane.b32.xlu0 %v1769, 94
        %v1787 = vpop.permute.xlu0 %1786
        %vm1788 = vcmask 769024
        %v1789 = vsel %vm1788, %v1771, %v1773
        %v1790 = vsel %vm1788, %v1773, %v1775
        %v1791 = vsel %vm1788, %v1775, %v1777
        %v1792 = vsel %vm1788, %v1777, %v1779
        %v1793 = vsel %vm1788, %v1779, %v1781
        %v1794 = vsel %vm1788, %v1781, %v1783
        %v1795 = vsel %vm1788, %v1783, %v1785
        %v1796 = vsel %vm1788, %v1785, %v1787
        %v1798 = vsel %vm311, %v1725, 0
        %v1801 = vsel %vm315, %v1789, 0
        %v1804 = vsel %vm315, %v1790, 0
        %v1807 = vsel %vm315, %v1791, 0
        %v1810 = vsel %vm315, %v1792, 0
        %v1813 = vsel %vm315, %v1793, 0
        %v1816 = vsel %vm315, %v1794, 0
        %v1819 = vsel %vm315, %v1795, 0
        %v1822 = vsel %vm315, %v1796, 0
        %1824 = vmatprep.subr.bf16.mxu0 %v1804
        %1825 = vmatpush1.bf16.msra.mxu0 %v1801
        %1826 = vmatprep.subr.bf16.mxu0 0
        %1827 = vmatpush1.bf16.msra.mxu0 0
        %1828 = vmatprep.subr.bf16.mxu0 0
        %1829 = vmatpush1.bf16.msra.mxu0 0
        %1830 = vmatprep.subr.bf16.mxu0 0
        %1831 = vmatpush1.bf16.msra.mxu0 0
        %1832 = vmatprep.subr.bf16.mxu0 0
        %1833 = vmatpush1.bf16.msra.mxu0 0
        %1834 = vmatprep.subr.bf16.mxu0 0
        %1835 = vmatpush1.bf16.msra.mxu0 0
        %1836 = vmatprep.subr.bf16.mxu0 0
        %1837 = vmatpush1.bf16.msra.mxu0 0
        %1838 = vmatprep.subr.bf16.mxu0 0
        %1839 = vmatpush1.bf16.msra.mxu0 0
        %1840 = vmatprep.subr.bf16.mxu0 0
        %1841 = vmatpush1.bf16.msra.mxu0 0
        %1842 = vmatprep.subr.bf16.mxu0 0
        %1843 = vmatpush1.bf16.msra.mxu0 0
        %1844 = vmatprep.subr.bf16.mxu0 0
        %1845 = vmatpush1.bf16.msra.mxu0 0
        %1846 = vmatprep.subr.bf16.mxu0 0
        %1847 = vmatpush1.bf16.msra.mxu0 0
        %1848 = vmatprep.subr.bf16.mxu0 0
        %1849 = vmatpush1.bf16.msra.mxu0 0
        %1850 = vmatprep.subr.bf16.mxu0 0
        %1851 = vmatpush1.bf16.msra.mxu0 0
        %1852 = vmatprep.subr.bf16.mxu0 0
        %1853 = vmatpush1.bf16.msra.mxu0 0
        %1854 = vmatprep.subr.bf16.mxu0 0
        %1855 = vmatpush1.bf16.msra.mxu0 0
        %1856 = vmatprep.mubr.bf16.mxu0 0
        %1857 = vmatmul.mubr.bf16.gmra.mrb[0].mxu0 %v1798
        %v1858 = vpop.f32.mrb[0].mxu0
        %v1859 = vadd.f32 0.0, %v1858
        %v1860 = vpop.f32.mrb[0].mxu0
        %v1861 = vadd.f32 0.0, %v1860
        %v1862 = vpop.f32.mrb[0].mxu0
        %v1863 = vpop.f32.mrb[0].mxu0
        %1864 = vdwg.mxu0
        %1865 = vmatprep.subr.bf16.mxu0 %v1810
        %1866 = vmatpush1.bf16.msra.mxu0 %v1807
        %1867 = vmatprep.subr.bf16.mxu0 0
        %1868 = vmatpush1.bf16.msra.mxu0 0
        %1869 = vmatprep.subr.bf16.mxu0 0
        %1870 = vmatpush1.bf16.msra.mxu0 0
        %1871 = vmatprep.subr.bf16.mxu0 0
        %1872 = vmatpush1.bf16.msra.mxu0 0
        %1873 = vmatprep.subr.bf16.mxu0 0
        %1874 = vmatpush1.bf16.msra.mxu0 0
        %1875 = vmatprep.subr.bf16.mxu0 0
        %1876 = vmatpush1.bf16.msra.mxu0 0
        %1877 = vmatprep.subr.bf16.mxu0 0
        %1878 = vmatpush1.bf16.msra.mxu0 0
        %1879 = vmatprep.subr.bf16.mxu0 0
        %1880 = vmatpush1.bf16.msra.mxu0 0
        %1881 = vmatprep.subr.bf16.mxu0 0
        %1882 = vmatpush1.bf16.msra.mxu0 0
        %1883 = vmatprep.subr.bf16.mxu0 0
        %1884 = vmatpush1.bf16.msra.mxu0 0
        %1885 = vmatprep.subr.bf16.mxu0 0
        %1886 = vmatpush1.bf16.msra.mxu0 0
        %1887 = vmatprep.subr.bf16.mxu0 0
        %1888 = vmatpush1.bf16.msra.mxu0 0
        %1889 = vmatprep.subr.bf16.mxu0 0
        %1890 = vmatpush1.bf16.msra.mxu0 0
        %1891 = vmatprep.subr.bf16.mxu0 0
        %1892 = vmatpush1.bf16.msra.mxu0 0
        %1893 = vmatprep.subr.bf16.mxu0 0
        %1894 = vmatpush1.bf16.msra.mxu0 0
        %1895 = vmatprep.subr.bf16.mxu0 0
        %1896 = vmatpush1.bf16.msra.mxu0 0
        %1897 = vmatprep.mubr.bf16.mxu0 0
        %1898 = vmatmul.mubr.bf16.gmra.mrb[0].mxu0 %v1798
        %v1899 = vpop.f32.mrb[0].mxu0
        %v1900 = vadd.f32 0.0, %v1899
        %v1901 = vpop.f32.mrb[0].mxu0
        %v1902 = vadd.f32 0.0, %v1901
        %v1903 = vpop.f32.mrb[0].mxu0
        %v1904 = vpop.f32.mrb[0].mxu0
        %1905 = vdwg.mxu0
        %1906 = vmatprep.subr.bf16.mxu0 %v1816
        %1907 = vmatpush1.bf16.msra.mxu0 %v1813
        %1908 = vmatprep.subr.bf16.mxu0 0
        %1909 = vmatpush1.bf16.msra.mxu0 0
        %1910 = vmatprep.subr.bf16.mxu0 0
        %1911 = vmatpush1.bf16.msra.mxu0 0
        %1912 = vmatprep.subr.bf16.mxu0 0
        %1913 = vmatpush1.bf16.msra.mxu0 0
        %1914 = vmatprep.subr.bf16.mxu0 0
        %1915 = vmatpush1.bf16.msra.mxu0 0
        %1916 = vmatprep.subr.bf16.mxu0 0
        %1917 = vmatpush1.bf16.msra.mxu0 0
        %1918 = vmatprep.subr.bf16.mxu0 0
        %1919 = vmatpush1.bf16.msra.mxu0 0
        %1920 = vmatprep.subr.bf16.mxu0 0
        %1921 = vmatpush1.bf16.msra.mxu0 0
        %1922 = vmatprep.subr.bf16.mxu0 0
        %1923 = vmatpush1.bf16.msra.mxu0 0
        %1924 = vmatprep.subr.bf16.mxu0 0
        %1925 = vmatpush1.bf16.msra.mxu0 0
        %1926 = vmatprep.subr.bf16.mxu0 0
        %1927 = vmatpush1.bf16.msra.mxu0 0
        %1928 = vmatprep.subr.bf16.mxu0 0
        %1929 = vmatpush1.bf16.msra.mxu0 0
        %1930 = vmatprep.subr.bf16.mxu0 0
        %1931 = vmatpush1.bf16.msra.mxu0 0
        %1932 = vmatprep.subr.bf16.mxu0 0
        %1933 = vmatpush1.bf16.msra.mxu0 0
        %1934 = vmatprep.subr.bf16.mxu0 0
        %1935 = vmatpush1.bf16.msra.mxu0 0
        %1936 = vmatprep.subr.bf16.mxu0 0
        %1937 = vmatpush1.bf16.msra.mxu0 0
        %1938 = vmatprep.mubr.bf16.mxu0 0
        %1939 = vmatmul.mubr.bf16.gmra.mrb[0].mxu0 %v1798
        %v1940 = vpop.f32.mrb[0].mxu0
        %v1941 = vadd.f32 0.0, %v1940
        %v1942 = vpop.f32.mrb[0].mxu0
        %v1943 = vadd.f32 0.0, %v1942
        %v1944 = vpop.f32.mrb[0].mxu0
        %v1945 = vpop.f32.mrb[0].mxu0
        %1946 = vdwg.mxu0
        %1947 = vmatprep.subr.bf16.mxu0 %v1822
        %1948 = vmatpush1.bf16.msra.mxu0 %v1819
        %1949 = vmatprep.subr.bf16.mxu0 0
        %1950 = vmatpush1.bf16.msra.mxu0 0
        %1951 = vmatprep.subr.bf16.mxu0 0
        %1952 = vmatpush1.bf16.msra.mxu0 0
        %1953 = vmatprep.subr.bf16.mxu0 0
        %1954 = vmatpush1.bf16.msra.mxu0 0
        %1955 = vmatprep.subr.bf16.mxu0 0
        %1956 = vmatpush1.bf16.msra.mxu0 0
        %1957 = vmatprep.subr.bf16.mxu0 0
        %1958 = vmatpush1.bf16.msra.mxu0 0
        %1959 = vmatprep.subr.bf16.mxu0 0
        %1960 = vmatpush1.bf16.msra.mxu0 0
        %1961 = vmatprep.subr.bf16.mxu0 0
        %1962 = vmatpush1.bf16.msra.mxu0 0
        %1963 = vmatprep.subr.bf16.mxu0 0
        %1964 = vmatpush1.bf16.msra.mxu0 0
        %1965 = vmatprep.subr.bf16.mxu0 0
        %1966 = vmatpush1.bf16.msra.mxu0 0
        %1967 = vmatprep.subr.bf16.mxu0 0
        %1968 = vmatpush1.bf16.msra.mxu0 0
        %1969 = vmatprep.subr.bf16.mxu0 0
        %1970 = vmatpush1.bf16.msra.mxu0 0
        %1971 = vmatprep.subr.bf16.mxu0 0
        %1972 = vmatpush1.bf16.msra.mxu0 0
        %1973 = vmatprep.subr.bf16.mxu0 0
        %1974 = vmatpush1.bf16.msra.mxu0 0
        %1975 = vmatprep.subr.bf16.mxu0 0
        %1976 = vmatpush1.bf16.msra.mxu0 0
        %1977 = vmatprep.subr.bf16.mxu0 0
        %1978 = vmatpush1.bf16.msra.mxu0 0
        %1979 = vmatprep.mubr.bf16.mxu0 0
        %1980 = vmatmul.mubr.bf16.gmra.mrb[0].mxu0 %v1798
        %v1981 = vpop.f32.mrb[0].mxu0
        %v1982 = vadd.f32 0.0, %v1981
        %v1983 = vpop.f32.mrb[0].mxu0
        %v1984 = vadd.f32 0.0, %v1983
        %v1985 = vpop.f32.mrb[0].mxu0
        %v1986 = vpop.f32.mrb[0].mxu0
        %1987 = vdwg.mxu0
        %v1988 = vmul.f32 %v1859, %v1110
        %v1989 = vmul.f32 %v1861, %v1114
        %v1990 = vmul.f32 %v1900, %v1118
        %v1991 = vmul.f32 %v1902, %v1122
        %v1992 = vmul.f32 %v1941, %v1126
        %v1993 = vmul.f32 %v1943, %v1130
        %v1994 = vmul.f32 %v1982, %v1134
        %v1995 = vmul.f32 %v1984, %v1138
        %v1996 = vadd.f32 %v1713, %v1988
        %v1997 = vadd.f32 %v1714, %v1989
        %v1998 = vadd.f32 %v1715, %v1990
        %v1999 = vadd.f32 %v1716, %v1991
        %v2000 = vadd.f32 %v1717, %v1992
        %v2001 = vadd.f32 %v1718, %v1993
        %v2002 = vadd.f32 %v1719, %v1994
        %v2003 = vadd.f32 %v1720, %v1995
        %v2004 = vld [vmem:[%s262] sm:$0xff]
        %v2005 = vld [vmem:[%s262 + $0x8] sm:$0xff]
        %v2006 = vld [vmem:[%s262 + $0x10] sm:$0x3]
        %s2007 = scalar_lea.vmem %s1, 24
        %v2008 = vld [vmem:[%s2007] sm:$0xf]
        %v2012 = vcombine.high %v2004, %v2004
        %v2014 = vunpack.c.l.s4 1983009808
        %v2015 = vunpack.c.0.s8 %v2014
        %v2016 = vlaneseq
        %v2017 = vshrl.u32 %v2016, 7
        %v2018 = vsub.s32 %v2015, %v2017
        %v2019 = vrot.slane %v2004, %v2018
        %v2021 = vunpack.c.l.s4 1983009808
        %v2022 = vunpack.c.0.s8 %v2021
        %v2023 = vlaneseq
        %v2024 = vshrl.u32 %v2023, 7
        %v2025 = vsub.s32 %v2022, %v2024
        %v2026 = vrot.slane %v2012, %v2025
        %v2027 = vcombine.high %v2019, %v2019
        %v2028 = vcombine.high %v2026, %v2026
        %v2029 = vcombine.high %v2005, %v2005
        %v2031 = vunpack.c.l.s4 1983009808
        %v2032 = vunpack.c.0.s8 %v2031
        %v2033 = vlaneseq
        %v2034 = vshrl.u32 %v2033, 7
        %v2035 = vsub.s32 %v2032, %v2034
        %v2036 = vrot.slane %v2005, %v2035
        %v2038 = vunpack.c.l.s4 1983009808
        %v2039 = vunpack.c.0.s8 %v2038
        %v2040 = vlaneseq
        %v2041 = vshrl.u32 %v2040, 7
        %v2042 = vsub.s32 %v2039, %v2041
        %v2043 = vrot.slane %v2029, %v2042
        %v2044 = vcombine.high %v2036, %v2036
        %v2045 = vcombine.high %v2043, %v2043
        %v2047 = vunpack.c.l.s4 1983009808
        %v2048 = vunpack.c.0.s8 %v2047
        %v2049 = vlaneseq
        %v2050 = vshrl.u32 %v2049, 7
        %v2051 = vsub.s32 %v2048, %v2050
        %v2052 = vrot.slane %v2006, %v2051
        %2053 = vrot.lane.b32.xlu0 %v2019, 64
        %v2054 = vpop.permute.xlu0 %2053
        %2055 = vrot.lane.b32.xlu0 %v2027, 64
        %v2056 = vpop.permute.xlu0 %2055
        %2057 = vrot.lane.b32.xlu0 %v2026, 64
        %v2058 = vpop.permute.xlu0 %2057
        %2059 = vrot.lane.b32.xlu0 %v2028, 64
        %v2060 = vpop.permute.xlu0 %2059
        %2061 = vrot.lane.b32.xlu0 %v2036, 64
        %v2062 = vpop.permute.xlu0 %2061
        %2063 = vrot.lane.b32.xlu0 %v2044, 64
        %v2064 = vpop.permute.xlu0 %2063
        %2065 = vrot.lane.b32.xlu0 %v2043, 64
        %v2066 = vpop.permute.xlu0 %2065
        %2067 = vrot.lane.b32.xlu0 %v2045, 64
        %v2068 = vpop.permute.xlu0 %2067
        %2069 = vrot.lane.b32.xlu0 %v2052, 64
        %v2070 = vpop.permute.xlu0 %2069
        %vm2071 = vcmask 523264
        %v2072 = vsel %vm2071, %v2054, %v2056
        %v2073 = vsel %vm2071, %v2056, %v2058
        %v2074 = vsel %vm2071, %v2058, %v2060
        %v2075 = vsel %vm2071, %v2060, %v2062
        %v2076 = vsel %vm2071, %v2062, %v2064
        %v2077 = vsel %vm2071, %v2064, %v2066
        %v2078 = vsel %vm2071, %v2066, %v2068
        %v2079 = vsel %vm2071, %v2068, %v2070
        %v2081 = vsel %vm311, %v2008, 0
        %v2084 = vsel %vm315, %v2072, 0
        %v2087 = vsel %vm315, %v2073, 0
        %v2090 = vsel %vm315, %v2074, 0
        %v2093 = vsel %vm315, %v2075, 0
        %v2096 = vsel %vm315, %v2076, 0
        %v2099 = vsel %vm315, %v2077, 0
        %v2102 = vsel %vm315, %v2078, 0
        %v2105 = vsel %vm315, %v2079, 0
        %2107 = vmatprep.subr.bf16.mxu0 %v2087
        %2108 = vmatpush1.bf16.msra.mxu0 %v2084
        %2109 = vmatprep.subr.bf16.mxu0 0
        %2110 = vmatpush1.bf16.msra.mxu0 0
        %2111 = vmatprep.subr.bf16.mxu0 0
        %2112 = vmatpush1.bf16.msra.mxu0 0
        %2113 = vmatprep.subr.bf16.mxu0 0
        %2114 = vmatpush1.bf16.msra.mxu0 0
        %2115 = vmatprep.subr.bf16.mxu0 0
        %2116 = vmatpush1.bf16.msra.mxu0 0
        %2117 = vmatprep.subr.bf16.mxu0 0
        %2118 = vmatpush1.bf16.msra.mxu0 0
        %2119 = vmatprep.subr.bf16.mxu0 0
        %2120 = vmatpush1.bf16.msra.mxu0 0
        %2121 = vmatprep.subr.bf16.mxu0 0
        %2122 = vmatpush1.bf16.msra.mxu0 0
        %2123 = vmatprep.subr.bf16.mxu0 0
        %2124 = vmatpush1.bf16.msra.mxu0 0
        %2125 = vmatprep.subr.bf16.mxu0 0
        %2126 = vmatpush1.bf16.msra.mxu0 0
        %2127 = vmatprep.subr.bf16.mxu0 0
        %2128 = vmatpush1.bf16.msra.mxu0 0
        %2129 = vmatprep.subr.bf16.mxu0 0
        %2130 = vmatpush1.bf16.msra.mxu0 0
        %2131 = vmatprep.subr.bf16.mxu0 0
        %2132 = vmatpush1.bf16.msra.mxu0 0
        %2133 = vmatprep.subr.bf16.mxu0 0
        %2134 = vmatpush1.bf16.msra.mxu0 0
        %2135 = vmatprep.subr.bf16.mxu0 0
        %2136 = vmatpush1.bf16.msra.mxu0 0
        %2137 = vmatprep.subr.bf16.mxu0 0
        %2138 = vmatpush1.bf16.msra.mxu0 0
        %2139 = vmatprep.mubr.bf16.mxu0 0
        %2140 = vmatmul.mubr.bf16.gmra.mrb[0].mxu0 %v2081
        %v2141 = vpop.f32.mrb[0].mxu0
        %v2142 = vadd.f32 0.0, %v2141
        %v2143 = vpop.f32.mrb[0].mxu0
        %v2144 = vadd.f32 0.0, %v2143
        %v2145 = vpop.f32.mrb[0].mxu0
        %v2146 = vpop.f32.mrb[0].mxu0
        %2147 = vdwg.mxu0
        %2148 = vmatprep.subr.bf16.mxu0 %v2093
        %2149 = vmatpush1.bf16.msra.mxu0 %v2090
        %2150 = vmatprep.subr.bf16.mxu0 0
        %2151 = vmatpush1.bf16.msra.mxu0 0
        %2152 = vmatprep.subr.bf16.mxu0 0
        %2153 = vmatpush1.bf16.msra.mxu0 0
        %2154 = vmatprep.subr.bf16.mxu0 0
        %2155 = vmatpush1.bf16.msra.mxu0 0
        %2156 = vmatprep.subr.bf16.mxu0 0
        %2157 = vmatpush1.bf16.msra.mxu0 0
        %2158 = vmatprep.subr.bf16.mxu0 0
        %2159 = vmatpush1.bf16.msra.mxu0 0
        %2160 = vmatprep.subr.bf16.mxu0 0
        %2161 = vmatpush1.bf16.msra.mxu0 0
        %2162 = vmatprep.subr.bf16.mxu0 0
        %2163 = vmatpush1.bf16.msra.mxu0 0
        %2164 = vmatprep.subr.bf16.mxu0 0
        %2165 = vmatpush1.bf16.msra.mxu0 0
        %2166 = vmatprep.subr.bf16.mxu0 0
        %2167 = vmatpush1.bf16.msra.mxu0 0
        %2168 = vmatprep.subr.bf16.mxu0 0
        %2169 = vmatpush1.bf16.msra.mxu0 0
        %2170 = vmatprep.subr.bf16.mxu0 0
        %2171 = vmatpush1.bf16.msra.mxu0 0
        %2172 = vmatprep.subr.bf16.mxu0 0
        %2173 = vmatpush1.bf16.msra.mxu0 0
        %2174 = vmatprep.subr.bf16.mxu0 0
        %2175 = vmatpush1.bf16.msra.mxu0 0
        %2176 = vmatprep.subr.bf16.mxu0 0
        %2177 = vmatpush1.bf16.msra.mxu0 0
        %2178 = vmatprep.subr.bf16.mxu0 0
        %2179 = vmatpush1.bf16.msra.mxu0 0
        %2180 = vmatprep.mubr.bf16.mxu0 0
        %2181 = vmatmul.mubr.bf16.gmra.mrb[0].mxu0 %v2081
        %v2182 = vpop.f32.mrb[0].mxu0
        %v2183 = vadd.f32 0.0, %v2182
        %v2184 = vpop.f32.mrb[0].mxu0
        %v2185 = vadd.f32 0.0, %v2184
        %v2186 = vpop.f32.mrb[0].mxu0
        %v2187 = vpop.f32.mrb[0].mxu0
        %2188 = vdwg.mxu0
        %2189 = vmatprep.subr.bf16.mxu0 %v2099
        %2190 = vmatpush1.bf16.msra.mxu0 %v2096
        %2191 = vmatprep.subr.bf16.mxu0 0
        %2192 = vmatpush1.bf16.msra.mxu0 0
        %2193 = vmatprep.subr.bf16.mxu0 0
        %2194 = vmatpush1.bf16.msra.mxu0 0
        %2195 = vmatprep.subr.bf16.mxu0 0
        %2196 = vmatpush1.bf16.msra.mxu0 0
        %2197 = vmatprep.subr.bf16.mxu0 0
        %2198 = vmatpush1.bf16.msra.mxu0 0
        %2199 = vmatprep.subr.bf16.mxu0 0
        %2200 = vmatpush1.bf16.msra.mxu0 0
        %2201 = vmatprep.subr.bf16.mxu0 0
        %2202 = vmatpush1.bf16.msra.mxu0 0
        %2203 = vmatprep.subr.bf16.mxu0 0
        %2204 = vmatpush1.bf16.msra.mxu0 0
        %2205 = vmatprep.subr.bf16.mxu0 0
        %2206 = vmatpush1.bf16.msra.mxu0 0
        %2207 = vmatprep.subr.bf16.mxu0 0
        %2208 = vmatpush1.bf16.msra.mxu0 0
        %2209 = vmatprep.subr.bf16.mxu0 0
        %2210 = vmatpush1.bf16.msra.mxu0 0
        %2211 = vmatprep.subr.bf16.mxu0 0
        %2212 = vmatpush1.bf16.msra.mxu0 0
        %2213 = vmatprep.subr.bf16.mxu0 0
        %2214 = vmatpush1.bf16.msra.mxu0 0
        %2215 = vmatprep.subr.bf16.mxu0 0
        %2216 = vmatpush1.bf16.msra.mxu0 0
        %2217 = vmatprep.subr.bf16.mxu0 0
        %2218 = vmatpush1.bf16.msra.mxu0 0
        %2219 = vmatprep.subr.bf16.mxu0 0
        %2220 = vmatpush1.bf16.msra.mxu0 0
        %2221 = vmatprep.mubr.bf16.mxu0 0
        %2222 = vmatmul.mubr.bf16.gmra.mrb[0].mxu0 %v2081
        %v2223 = vpop.f32.mrb[0].mxu0
        %v2224 = vadd.f32 0.0, %v2223
        %v2225 = vpop.f32.mrb[0].mxu0
        %v2226 = vadd.f32 0.0, %v2225
        %v2227 = vpop.f32.mrb[0].mxu0
        %v2228 = vpop.f32.mrb[0].mxu0
        %2229 = vdwg.mxu0
        %2230 = vmatprep.subr.bf16.mxu0 %v2105
        %2231 = vmatpush1.bf16.msra.mxu0 %v2102
        %2232 = vmatprep.subr.bf16.mxu0 0
        %2233 = vmatpush1.bf16.msra.mxu0 0
        %2234 = vmatprep.subr.bf16.mxu0 0
        %2235 = vmatpush1.bf16.msra.mxu0 0
        %2236 = vmatprep.subr.bf16.mxu0 0
        %2237 = vmatpush1.bf16.msra.mxu0 0
        %2238 = vmatprep.subr.bf16.mxu0 0
        %2239 = vmatpush1.bf16.msra.mxu0 0
        %2240 = vmatprep.subr.bf16.mxu0 0
        %2241 = vmatpush1.bf16.msra.mxu0 0
        %2242 = vmatprep.subr.bf16.mxu0 0
        %2243 = vmatpush1.bf16.msra.mxu0 0
        %2244 = vmatprep.subr.bf16.mxu0 0
        %2245 = vmatpush1.bf16.msra.mxu0 0
        %2246 = vmatprep.subr.bf16.mxu0 0
        %2247 = vmatpush1.bf16.msra.mxu0 0
        %2248 = vmatprep.subr.bf16.mxu0 0
        %2249 = vmatpush1.bf16.msra.mxu0 0
        %2250 = vmatprep.subr.bf16.mxu0 0
        %2251 = vmatpush1.bf16.msra.mxu0 0
        %2252 = vmatprep.subr.bf16.mxu0 0
        %2253 = vmatpush1.bf16.msra.mxu0 0
        %2254 = vmatprep.subr.bf16.mxu0 0
        %2255 = vmatpush1.bf16.msra.mxu0 0
        %2256 = vmatprep.subr.bf16.mxu0 0
        %2257 = vmatpush1.bf16.msra.mxu0 0
        %2258 = vmatprep.subr.bf16.mxu0 0
        %2259 = vmatpush1.bf16.msra.mxu0 0
        %2260 = vmatprep.subr.bf16.mxu0 0
        %2261 = vmatpush1.bf16.msra.mxu0 0
        %2262 = vmatprep.mubr.bf16.mxu0 0
        %2263 = vmatmul.mubr.bf16.gmra.mrb[0].mxu0 %v2081
        %v2264 = vpop.f32.mrb[0].mxu0
        %v2265 = vadd.f32 0.0, %v2264
        %v2266 = vpop.f32.mrb[0].mxu0
        %v2267 = vadd.f32 0.0, %v2266
        %v2268 = vpop.f32.mrb[0].mxu0
        %v2269 = vpop.f32.mrb[0].mxu0
        %2270 = vdwg.mxu0
        %v2271 = vmul.f32 %v2142, %v509
        %v2272 = vmul.f32 %v2144, %v513
        %v2273 = vmul.f32 %v2183, %v517
        %v2274 = vmul.f32 %v2185, %v521
        %v2275 = vmul.f32 %v2224, %v525
        %v2276 = vmul.f32 %v2226, %v529
        %v2277 = vmul.f32 %v2265, %v533
        %v2278 = vmul.f32 %v2267, %v537
        %v2279 = vadd.f32 %v1996, %v2271
        %v2280 = vadd.f32 %v1997, %v2272
        %v2281 = vadd.f32 %v1998, %v2273
        %v2282 = vadd.f32 %v1999, %v2274
        %v2283 = vadd.f32 %v2000, %v2275
        %v2284 = vadd.f32 %v2001, %v2276
        %v2285 = vadd.f32 %v2002, %v2277
        %v2286 = vadd.f32 %v2003, %v2278
        %v2287 = vld [vmem:[%s262] sm:$0xff]
        %v2288 = vld [vmem:[%s262 + $0x8] sm:$0xff]
        %v2289 = vld [vmem:[%s262 + $0x10] sm:$0x3]
        %s2290 = scalar_lea.vmem %s1, 28
        %v2291 = vld [vmem:[%s2290] sm:$0xf]
        %v2295 = vcombine.high %v2287, %v2287
        %v2297 = vunpack.c.l.s4 1983009808
        %v2298 = vunpack.c.0.s8 %v2297
        %v2299 = vlaneseq
        %v2300 = vshrl.u32 %v2299, 7
        %v2301 = vsub.s32 %v2298, %v2300
        %v2302 = vrot.slane %v2287, %v2301
        %v2304 = vunpack.c.l.s4 1983009808
        %v2305 = vunpack.c.0.s8 %v2304
        %v2306 = vlaneseq
        %v2307 = vshrl.u32 %v2306, 7
        %v2308 = vsub.s32 %v2305, %v2307
        %v2309 = vrot.slane %v2295, %v2308
        %v2310 = vcombine.high %v2302, %v2302
        %v2311 = vcombine.high %v2309, %v2309
        %v2312 = vcombine.high %v2288, %v2288
        %v2314 = vunpack.c.l.s4 1983009808
        %v2315 = vunpack.c.0.s8 %v2314
        %v2316 = vlaneseq
        %v2317 = vshrl.u32 %v2316, 7
        %v2318 = vsub.s32 %v2315, %v2317
        %v2319 = vrot.slane %v2288, %v2318
        %v2321 = vunpack.c.l.s4 1983009808
        %v2322 = vunpack.c.0.s8 %v2321
        %v2323 = vlaneseq
        %v2324 = vshrl.u32 %v2323, 7
        %v2325 = vsub.s32 %v2322, %v2324
        %v2326 = vrot.slane %v2312, %v2325
        %v2327 = vcombine.high %v2319, %v2319
        %v2328 = vcombine.high %v2326, %v2326
        %v2330 = vunpack.c.l.s4 1983009808
        %v2331 = vunpack.c.0.s8 %v2330
        %v2332 = vlaneseq
        %v2333 = vshrl.u32 %v2332, 7
        %v2334 = vsub.s32 %v2331, %v2333
        %v2335 = vrot.slane %v2289, %v2334
        %2336 = vrot.lane.b32.xlu0 %v2302, 63
        %v2337 = vpop.permute.xlu0 %2336
        %2338 = vrot.lane.b32.xlu0 %v2310, 63
        %v2339 = vpop.permute.xlu0 %2338
        %2340 = vrot.lane.b32.xlu0 %v2309, 63
        %v2341 = vpop.permute.xlu0 %2340
        %2342 = vrot.lane.b32.xlu0 %v2311, 63
        %v2343 = vpop.permute.xlu0 %2342
        %2344 = vrot.lane.b32.xlu0 %v2319, 63
        %v2345 = vpop.permute.xlu0 %2344
        %2346 = vrot.lane.b32.xlu0 %v2327, 63
        %v2347 = vpop.permute.xlu0 %2346
        %2348 = vrot.lane.b32.xlu0 %v2326, 63
        %v2349 = vpop.permute.xlu0 %2348
        %2350 = vrot.lane.b32.xlu0 %v2328, 63
        %v2351 = vpop.permute.xlu0 %2350
        %2352 = vrot.lane.b32.xlu0 %v2335, 63
        %v2353 = vpop.permute.xlu0 %2352
        %vm2354 = vcmask 515072
        %v2355 = vsel %vm2354, %v2337, %v2339
        %v2356 = vsel %vm2354, %v2339, %v2341
        %v2357 = vsel %vm2354, %v2341, %v2343
        %v2358 = vsel %vm2354, %v2343, %v2345
        %v2359 = vsel %vm2354, %v2345, %v2347
        %v2360 = vsel %vm2354, %v2347, %v2349
        %v2361 = vsel %vm2354, %v2349, %v2351
        %v2362 = vsel %vm2354, %v2351, %v2353
        %v2364 = vsel %vm311, %v2291, 0
        %v2367 = vsel %vm315, %v2355, 0
        %v2370 = vsel %vm315, %v2356, 0
        %v2373 = vsel %vm315, %v2357, 0
        %v2376 = vsel %vm315, %v2358, 0
        %v2379 = vsel %vm315, %v2359, 0
        %v2382 = vsel %vm315, %v2360, 0
        %v2385 = vsel %vm315, %v2361, 0
        %v2388 = vsel %vm315, %v2362, 0
        %2390 = vmatprep.subr.bf16.mxu0 %v2370
        %2391 = vmatpush1.bf16.msra.mxu0 %v2367
        %2392 = vmatprep.subr.bf16.mxu0 0
        %2393 = vmatpush1.bf16.msra.mxu0 0
        %2394 = vmatprep.subr.bf16.mxu0 0
        %2395 = vmatpush1.bf16.msra.mxu0 0
        %2396 = vmatprep.subr.bf16.mxu0 0
        %2397 = vmatpush1.bf16.msra.mxu0 0
        %2398 = vmatprep.subr.bf16.mxu0 0
        %2399 = vmatpush1.bf16.msra.mxu0 0
        %2400 = vmatprep.subr.bf16.mxu0 0
        %2401 = vmatpush1.bf16.msra.mxu0 0
        %2402 = vmatprep.subr.bf16.mxu0 0
        %2403 = vmatpush1.bf16.msra.mxu0 0
        %2404 = vmatprep.subr.bf16.mxu0 0
        %2405 = vmatpush1.bf16.msra.mxu0 0
        %2406 = vmatprep.subr.bf16.mxu0 0
        %2407 = vmatpush1.bf16.msra.mxu0 0
        %2408 = vmatprep.subr.bf16.mxu0 0
        %2409 = vmatpush1.bf16.msra.mxu0 0
        %2410 = vmatprep.subr.bf16.mxu0 0
        %2411 = vmatpush1.bf16.msra.mxu0 0
        %2412 = vmatprep.subr.bf16.mxu0 0
        %2413 = vmatpush1.bf16.msra.mxu0 0
        %2414 = vmatprep.subr.bf16.mxu0 0
        %2415 = vmatpush1.bf16.msra.mxu0 0
        %2416 = vmatprep.subr.bf16.mxu0 0
        %2417 = vmatpush1.bf16.msra.mxu0 0
        %2418 = vmatprep.subr.bf16.mxu0 0
        %2419 = vmatpush1.bf16.msra.mxu0 0
        %2420 = vmatprep.subr.bf16.mxu0 0
        %2421 = vmatpush1.bf16.msra.mxu0 0
        %2422 = vmatprep.mubr.bf16.mxu0 0
        %2423 = vmatmul.mubr.bf16.gmra.mrb[0].mxu0 %v2364
        %v2424 = vpop.f32.mrb[0].mxu0
        %v2425 = vadd.f32 0.0, %v2424
        %v2426 = vpop.f32.mrb[0].mxu0
        %v2427 = vadd.f32 0.0, %v2426
        %v2428 = vpop.f32.mrb[0].mxu0
        %v2429 = vpop.f32.mrb[0].mxu0
        %2430 = vdwg.mxu0
        %2431 = vmatprep.subr.bf16.mxu0 %v2376
        %2432 = vmatpush1.bf16.msra.mxu0 %v2373
        %2433 = vmatprep.subr.bf16.mxu0 0
        %2434 = vmatpush1.bf16.msra.mxu0 0
        %2435 = vmatprep.subr.bf16.mxu0 0
        %2436 = vmatpush1.bf16.msra.mxu0 0
        %2437 = vmatprep.subr.bf16.mxu0 0
        %2438 = vmatpush1.bf16.msra.mxu0 0
        %2439 = vmatprep.subr.bf16.mxu0 0
        %2440 = vmatpush1.bf16.msra.mxu0 0
        %2441 = vmatprep.subr.bf16.mxu0 0
        %2442 = vmatpush1.bf16.msra.mxu0 0
        %2443 = vmatprep.subr.bf16.mxu0 0
        %2444 = vmatpush1.bf16.msra.mxu0 0
        %2445 = vmatprep.subr.bf16.mxu0 0
        %2446 = vmatpush1.bf16.msra.mxu0 0
        %2447 = vmatprep.subr.bf16.mxu0 0
        %2448 = vmatpush1.bf16.msra.mxu0 0
        %2449 = vmatprep.subr.bf16.mxu0 0
        %2450 = vmatpush1.bf16.msra.mxu0 0
        %2451 = vmatprep.subr.bf16.mxu0 0
        %2452 = vmatpush1.bf16.msra.mxu0 0
        %2453 = vmatprep.subr.bf16.mxu0 0
        %2454 = vmatpush1.bf16.msra.mxu0 0
        %2455 = vmatprep.subr.bf16.mxu0 0
        %2456 = vmatpush1.bf16.msra.mxu0 0
        %2457 = vmatprep.subr.bf16.mxu0 0
        %2458 = vmatpush1.bf16.msra.mxu0 0
        %2459 = vmatprep.subr.bf16.mxu0 0
        %2460 = vmatpush1.bf16.msra.mxu0 0
        %2461 = vmatprep.subr.bf16.mxu0 0
        %2462 = vmatpush1.bf16.msra.mxu0 0
        %2463 = vmatprep.mubr.bf16.mxu0 0
        %2464 = vmatmul.mubr.bf16.gmra.mrb[0].mxu0 %v2364
        %v2465 = vpop.f32.mrb[0].mxu0
        %v2466 = vadd.f32 0.0, %v2465
        %v2467 = vpop.f32.mrb[0].mxu0
        %v2468 = vadd.f32 0.0, %v2467
        %v2469 = vpop.f32.mrb[0].mxu0
        %v2470 = vpop.f32.mrb[0].mxu0
        %2471 = vdwg.mxu0
        %2472 = vmatprep.subr.bf16.mxu0 %v2382
        %2473 = vmatpush1.bf16.msra.mxu0 %v2379
        %2474 = vmatprep.subr.bf16.mxu0 0
        %2475 = vmatpush1.bf16.msra.mxu0 0
        %2476 = vmatprep.subr.bf16.mxu0 0
        %2477 = vmatpush1.bf16.msra.mxu0 0
        %2478 = vmatprep.subr.bf16.mxu0 0
        %2479 = vmatpush1.bf16.msra.mxu0 0
        %2480 = vmatprep.subr.bf16.mxu0 0
        %2481 = vmatpush1.bf16.msra.mxu0 0
        %2482 = vmatprep.subr.bf16.mxu0 0
        %2483 = vmatpush1.bf16.msra.mxu0 0
        %2484 = vmatprep.subr.bf16.mxu0 0
        %2485 = vmatpush1.bf16.msra.mxu0 0
        %2486 = vmatprep.subr.bf16.mxu0 0
        %2487 = vmatpush1.bf16.msra.mxu0 0
        %2488 = vmatprep.subr.bf16.mxu0 0
        %2489 = vmatpush1.bf16.msra.mxu0 0
        %2490 = vmatprep.subr.bf16.mxu0 0
        %2491 = vmatpush1.bf16.msra.mxu0 0
        %2492 = vmatprep.subr.bf16.mxu0 0
        %2493 = vmatpush1.bf16.msra.mxu0 0
        %2494 = vmatprep.subr.bf16.mxu0 0
        %2495 = vmatpush1.bf16.msra.mxu0 0
        %2496 = vmatprep.subr.bf16.mxu0 0
        %2497 = vmatpush1.bf16.msra.mxu0 0
        %2498 = vmatprep.subr.bf16.mxu0 0
        %2499 = vmatpush1.bf16.msra.mxu0 0
        %2500 = vmatprep.subr.bf16.mxu0 0
        %2501 = vmatpush1.bf16.msra.mxu0 0
        %2502 = vmatprep.subr.bf16.mxu0 0
        %2503 = vmatpush1.bf16.msra.mxu0 0
        %2504 = vmatprep.mubr.bf16.mxu0 0
        %2505 = vmatmul.mubr.bf16.gmra.mrb[0].mxu0 %v2364
        %v2506 = vpop.f32.mrb[0].mxu0
        %v2507 = vadd.f32 0.0, %v2506
        %v2508 = vpop.f32.mrb[0].mxu0
        %v2509 = vadd.f32 0.0, %v2508
        %v2510 = vpop.f32.mrb[0].mxu0
        %v2511 = vpop.f32.mrb[0].mxu0
        %2512 = vdwg.mxu0
        %2513 = vmatprep.subr.bf16.mxu0 %v2388
        %2514 = vmatpush1.bf16.msra.mxu0 %v2385
        %2515 = vmatprep.subr.bf16.mxu0 0
        %2516 = vmatpush1.bf16.msra.mxu0 0
        %2517 = vmatprep.subr.bf16.mxu0 0
        %2518 = vmatpush1.bf16.msra.mxu0 0
        %2519 = vmatprep.subr.bf16.mxu0 0
        %2520 = vmatpush1.bf16.msra.mxu0 0
        %2521 = vmatprep.subr.bf16.mxu0 0
        %2522 = vmatpush1.bf16.msra.mxu0 0
        %2523 = vmatprep.subr.bf16.mxu0 0
        %2524 = vmatpush1.bf16.msra.mxu0 0
        %2525 = vmatprep.subr.bf16.mxu0 0
        %2526 = vmatpush1.bf16.msra.mxu0 0
        %2527 = vmatprep.subr.bf16.mxu0 0
        %2528 = vmatpush1.bf16.msra.mxu0 0
        %2529 = vmatprep.subr.bf16.mxu0 0
        %2530 = vmatpush1.bf16.msra.mxu0 0
        %2531 = vmatprep.subr.bf16.mxu0 0
        %2532 = vmatpush1.bf16.msra.mxu0 0
        %2533 = vmatprep.subr.bf16.mxu0 0
        %2534 = vmatpush1.bf16.msra.mxu0 0
        %2535 = vmatprep.subr.bf16.mxu0 0
        %2536 = vmatpush1.bf16.msra.mxu0 0
        %2537 = vmatprep.subr.bf16.mxu0 0
        %2538 = vmatpush1.bf16.msra.mxu0 0
        %2539 = vmatprep.subr.bf16.mxu0 0
        %2540 = vmatpush1.bf16.msra.mxu0 0
        %2541 = vmatprep.subr.bf16.mxu0 0
        %2542 = vmatpush1.bf16.msra.mxu0 0
        %2543 = vmatprep.subr.bf16.mxu0 0
        %2544 = vmatpush1.bf16.msra.mxu0 0
        %2545 = vmatprep.mubr.bf16.mxu0 0
        %2546 = vmatmul.mubr.bf16.gmra.mrb[0].mxu0 %v2364
        %v2547 = vpop.f32.mrb[0].mxu0
        %v2548 = vadd.f32 0.0, %v2547
        %v2549 = vpop.f32.mrb[0].mxu0
        %v2550 = vadd.f32 0.0, %v2549
        %v2551 = vpop.f32.mrb[0].mxu0
        %v2552 = vpop.f32.mrb[0].mxu0
        %2553 = vdwg.mxu0
        %v2554 = vadd.f32 %v2279, %v2425
        %v2555 = vadd.f32 %v2280, %v2427
        %v2556 = vadd.f32 %v2281, %v2466
        %v2557 = vadd.f32 %v2282, %v2468
        %v2558 = vadd.f32 %v2283, %v2507
        %v2559 = vadd.f32 %v2284, %v2509
        %v2560 = vadd.f32 %v2285, %v2548
        %v2561 = vadd.f32 %v2286, %v2550
        %v2562 = vld [vmem:[%s262] sm:$0xff]
        %v2563 = vld [vmem:[%s262 + $0x8] sm:$0xff]
        %v2564 = vld [vmem:[%s262 + $0x10] sm:$0x3]
        %s2565 = scalar_lea.vmem %s1, 32
        %v2566 = vld [vmem:[%s2565] sm:$0xf]
        %v2570 = vcombine.high %v2562, %v2562
        %v2572 = vunpack.c.l.s4 1983009808
        %v2573 = vunpack.c.0.s8 %v2572
        %v2574 = vlaneseq
        %v2575 = vshrl.u32 %v2574, 7
        %v2576 = vsub.s32 %v2573, %v2575
        %v2577 = vrot.slane %v2562, %v2576
        %v2579 = vunpack.c.l.s4 1983009808
        %v2580 = vunpack.c.0.s8 %v2579
        %v2581 = vlaneseq
        %v2582 = vshrl.u32 %v2581, 7
        %v2583 = vsub.s32 %v2580, %v2582
        %v2584 = vrot.slane %v2570, %v2583
        %v2585 = vcombine.high %v2577, %v2577
        %v2586 = vcombine.high %v2584, %v2584
        %v2587 = vcombine.high %v2563, %v2563
        %v2589 = vunpack.c.l.s4 1983009808
        %v2590 = vunpack.c.0.s8 %v2589
        %v2591 = vlaneseq
        %v2592 = vshrl.u32 %v2591, 7
        %v2593 = vsub.s32 %v2590, %v2592
        %v2594 = vrot.slane %v2563, %v2593
        %v2596 = vunpack.c.l.s4 1983009808
        %v2597 = vunpack.c.0.s8 %v2596
        %v2598 = vlaneseq
        %v2599 = vshrl.u32 %v2598, 7
        %v2600 = vsub.s32 %v2597, %v2599
        %v2601 = vrot.slane %v2587, %v2600
        %v2602 = vcombine.high %v2594, %v2594
        %v2603 = vcombine.high %v2601, %v2601
        %v2605 = vunpack.c.l.s4 1983009808
        %v2606 = vunpack.c.0.s8 %v2605
        %v2607 = vlaneseq
        %v2608 = vshrl.u32 %v2607, 7
        %v2609 = vsub.s32 %v2606, %v2608
        %v2610 = vrot.slane %v2564, %v2609
        %2611 = vrot.lane.b32.xlu0 %v2577, 62
        %v2612 = vpop.permute.xlu0 %2611
        %2613 = vrot.lane.b32.xlu0 %v2585, 62
        %v2614 = vpop.permute.xlu0 %2613
        %2615 = vrot.lane.b32.xlu0 %v2584, 62
        %v2616 = vpop.permute.xlu0 %2615
        %2617 = vrot.lane.b32.xlu0 %v2586, 62
        %v2618 = vpop.permute.xlu0 %2617
        %2619 = vrot.lane.b32.xlu0 %v2594, 62
        %v2620 = vpop.permute.xlu0 %2619
        %2621 = vrot.lane.b32.xlu0 %v2602, 62
        %v2622 = vpop.permute.xlu0 %2621
        %2623 = vrot.lane.b32.xlu0 %v2601, 62
        %v2624 = vpop.permute.xlu0 %2623
        %2625 = vrot.lane.b32.xlu0 %v2603, 62
        %v2626 = vpop.permute.xlu0 %2625
        %2627 = vrot.lane.b32.xlu0 %v2610, 62
        %v2628 = vpop.permute.xlu0 %2627
        %vm2629 = vcmask 506880
        %v2630 = vsel %vm2629, %v2612, %v2614
        %v2631 = vsel %vm2629, %v2614, %v2616
        %v2632 = vsel %vm2629, %v2616, %v2618
        %v2633 = vsel %vm2629, %v2618, %v2620
        %v2634 = vsel %vm2629, %v2620, %v2622
        %v2635 = vsel %vm2629, %v2622, %v2624
        %v2636 = vsel %vm2629, %v2624, %v2626
        %v2637 = vsel %vm2629, %v2626, %v2628
        %v2639 = vsel %vm311, %v2566, 0
        %v2642 = vsel %vm315, %v2630, 0
        %v2645 = vsel %vm315, %v2631, 0
        %v2648 = vsel %vm315, %v2632, 0
        %v2651 = vsel %vm315, %v2633, 0
        %v2654 = vsel %vm315, %v2634, 0
        %v2657 = vsel %vm315, %v2635, 0
        %v2660 = vsel %vm315, %v2636, 0
        %v2663 = vsel %vm315, %v2637, 0
        %2665 = vmatprep.subr.bf16.mxu0 %v2645
        %2666 = vmatpush1.bf16.msra.mxu0 %v2642
        %2667 = vmatprep.subr.bf16.mxu0 0
        %2668 = vmatpush1.bf16.msra.mxu0 0
        %2669 = vmatprep.subr.bf16.mxu0 0
        %2670 = vmatpush1.bf16.msra.mxu0 0
        %2671 = vmatprep.subr.bf16.mxu0 0
        %2672 = vmatpush1.bf16.msra.mxu0 0
        %2673 = vmatprep.subr.bf16.mxu0 0
        %2674 = vmatpush1.bf16.msra.mxu0 0
        %2675 = vmatprep.subr.bf16.mxu0 0
        %2676 = vmatpush1.bf16.msra.mxu0 0
        %2677 = vmatprep.subr.bf16.mxu0 0
        %2678 = vmatpush1.bf16.msra.mxu0 0
        %2679 = vmatprep.subr.bf16.mxu0 0
        %2680 = vmatpush1.bf16.msra.mxu0 0
        %2681 = vmatprep.subr.bf16.mxu0 0
        %2682 = vmatpush1.bf16.msra.mxu0 0
        %2683 = vmatprep.subr.bf16.mxu0 0
        %2684 = vmatpush1.bf16.msra.mxu0 0
        %2685 = vmatprep.subr.bf16.mxu0 0
        %2686 = vmatpush1.bf16.msra.mxu0 0
        %2687 = vmatprep.subr.bf16.mxu0 0
        %2688 = vmatpush1.bf16.msra.mxu0 0
        %2689 = vmatprep.subr.bf16.mxu0 0
        %2690 = vmatpush1.bf16.msra.mxu0 0
        %2691 = vmatprep.subr.bf16.mxu0 0
        %2692 = vmatpush1.bf16.msra.mxu0 0
        %2693 = vmatprep.subr.bf16.mxu0 0
        %2694 = vmatpush1.bf16.msra.mxu0 0
        %2695 = vmatprep.subr.bf16.mxu0 0
        %2696 = vmatpush1.bf16.msra.mxu0 0
        %2697 = vmatprep.mubr.bf16.mxu0 0
        %2698 = vmatmul.mubr.bf16.gmra.mrb[0].mxu0 %v2639
        %v2699 = vpop.f32.mrb[0].mxu0
        %v2700 = vadd.f32 0.0, %v2699
        %v2701 = vpop.f32.mrb[0].mxu0
        %v2702 = vadd.f32 0.0, %v2701
        %v2703 = vpop.f32.mrb[0].mxu0
        %v2704 = vpop.f32.mrb[0].mxu0
        %2705 = vdwg.mxu0
        %2706 = vmatprep.subr.bf16.mxu0 %v2651
        %2707 = vmatpush1.bf16.msra.mxu0 %v2648
        %2708 = vmatprep.subr.bf16.mxu0 0
        %2709 = vmatpush1.bf16.msra.mxu0 0
        %2710 = vmatprep.subr.bf16.mxu0 0
        %2711 = vmatpush1.bf16.msra.mxu0 0
        %2712 = vmatprep.subr.bf16.mxu0 0
        %2713 = vmatpush1.bf16.msra.mxu0 0
        %2714 = vmatprep.subr.bf16.mxu0 0
        %2715 = vmatpush1.bf16.msra.mxu0 0
        %2716 = vmatprep.subr.bf16.mxu0 0
        %2717 = vmatpush1.bf16.msra.mxu0 0
        %2718 = vmatprep.subr.bf16.mxu0 0
        %2719 = vmatpush1.bf16.msra.mxu0 0
        %2720 = vmatprep.subr.bf16.mxu0 0
        %2721 = vmatpush1.bf16.msra.mxu0 0
        %2722 = vmatprep.subr.bf16.mxu0 0
        %2723 = vmatpush1.bf16.msra.mxu0 0
        %2724 = vmatprep.subr.bf16.mxu0 0
        %2725 = vmatpush1.bf16.msra.mxu0 0
        %2726 = vmatprep.subr.bf16.mxu0 0
        %2727 = vmatpush1.bf16.msra.mxu0 0
        %2728 = vmatprep.subr.bf16.mxu0 0
        %2729 = vmatpush1.bf16.msra.mxu0 0
        %2730 = vmatprep.subr.bf16.mxu0 0
        %2731 = vmatpush1.bf16.msra.mxu0 0
        %2732 = vmatprep.subr.bf16.mxu0 0
        %2733 = vmatpush1.bf16.msra.mxu0 0
        %2734 = vmatprep.subr.bf16.mxu0 0
        %2735 = vmatpush1.bf16.msra.mxu0 0
        %2736 = vmatprep.subr.bf16.mxu0 0
        %2737 = vmatpush1.bf16.msra.mxu0 0
        %2738 = vmatprep.mubr.bf16.mxu0 0
        %2739 = vmatmul.mubr.bf16.gmra.mrb[0].mxu0 %v2639
        %v2740 = vpop.f32.mrb[0].mxu0
        %v2741 = vadd.f32 0.0, %v2740
        %v2742 = vpop.f32.mrb[0].mxu0
        %v2743 = vadd.f32 0.0, %v2742
        %v2744 = vpop.f32.mrb[0].mxu0
        %v2745 = vpop.f32.mrb[0].mxu0
        %2746 = vdwg.mxu0
        %2747 = vmatprep.subr.bf16.mxu0 %v2657
        %2748 = vmatpush1.bf16.msra.mxu0 %v2654
        %2749 = vmatprep.subr.bf16.mxu0 0
        %2750 = vmatpush1.bf16.msra.mxu0 0
        %2751 = vmatprep.subr.bf16.mxu0 0
        %2752 = vmatpush1.bf16.msra.mxu0 0
        %2753 = vmatprep.subr.bf16.mxu0 0
        %2754 = vmatpush1.bf16.msra.mxu0 0
        %2755 = vmatprep.subr.bf16.mxu0 0
        %2756 = vmatpush1.bf16.msra.mxu0 0
        %2757 = vmatprep.subr.bf16.mxu0 0
        %2758 = vmatpush1.bf16.msra.mxu0 0
        %2759 = vmatprep.subr.bf16.mxu0 0
        %2760 = vmatpush1.bf16.msra.mxu0 0
        %2761 = vmatprep.subr.bf16.mxu0 0
        %2762 = vmatpush1.bf16.msra.mxu0 0
        %2763 = vmatprep.subr.bf16.mxu0 0
        %2764 = vmatpush1.bf16.msra.mxu0 0
        %2765 = vmatprep.subr.bf16.mxu0 0
        %2766 = vmatpush1.bf16.msra.mxu0 0
        %2767 = vmatprep.subr.bf16.mxu0 0
        %2768 = vmatpush1.bf16.msra.mxu0 0
        %2769 = vmatprep.subr.bf16.mxu0 0
        %2770 = vmatpush1.bf16.msra.mxu0 0
        %2771 = vmatprep.subr.bf16.mxu0 0
        %2772 = vmatpush1.bf16.msra.mxu0 0
        %2773 = vmatprep.subr.bf16.mxu0 0
        %2774 = vmatpush1.bf16.msra.mxu0 0
        %2775 = vmatprep.subr.bf16.mxu0 0
        %2776 = vmatpush1.bf16.msra.mxu0 0
        %2777 = vmatprep.subr.bf16.mxu0 0
        %2778 = vmatpush1.bf16.msra.mxu0 0
        %2779 = vmatprep.mubr.bf16.mxu0 0
        %2780 = vmatmul.mubr.bf16.gmra.mrb[0].mxu0 %v2639
        %v2781 = vpop.f32.mrb[0].mxu0
        %v2782 = vadd.f32 0.0, %v2781
        %v2783 = vpop.f32.mrb[0].mxu0
        %v2784 = vadd.f32 0.0, %v2783
        %v2785 = vpop.f32.mrb[0].mxu0
        %v2786 = vpop.f32.mrb[0].mxu0
        %2787 = vdwg.mxu0
        %2788 = vmatprep.subr.bf16.mxu0 %v2663
        %2789 = vmatpush1.bf16.msra.mxu0 %v2660
        %2790 = vmatprep.subr.bf16.mxu0 0
        %2791 = vmatpush1.bf16.msra.mxu0 0
        %2792 = vmatprep.subr.bf16.mxu0 0
        %2793 = vmatpush1.bf16.msra.mxu0 0
        %2794 = vmatprep.subr.bf16.mxu0 0
        %2795 = vmatpush1.bf16.msra.mxu0 0
        %2796 = vmatprep.subr.bf16.mxu0 0
        %2797 = vmatpush1.bf16.msra.mxu0 0
        %2798 = vmatprep.subr.bf16.mxu0 0
        %2799 = vmatpush1.bf16.msra.mxu0 0
        %2800 = vmatprep.subr.bf16.mxu0 0
        %2801 = vmatpush1.bf16.msra.mxu0 0
        %2802 = vmatprep.subr.bf16.mxu0 0
        %2803 = vmatpush1.bf16.msra.mxu0 0
        %2804 = vmatprep.subr.bf16.mxu0 0
        %2805 = vmatpush1.bf16.msra.mxu0 0
        %2806 = vmatprep.subr.bf16.mxu0 0
        %2807 = vmatpush1.bf16.msra.mxu0 0
        %2808 = vmatprep.subr.bf16.mxu0 0
        %2809 = vmatpush1.bf16.msra.mxu0 0
        %2810 = vmatprep.subr.bf16.mxu0 0
        %2811 = vmatpush1.bf16.msra.mxu0 0
        %2812 = vmatprep.subr.bf16.mxu0 0
        %2813 = vmatpush1.bf16.msra.mxu0 0
        %2814 = vmatprep.subr.bf16.mxu0 0
        %2815 = vmatpush1.bf16.msra.mxu0 0
        %2816 = vmatprep.subr.bf16.mxu0 0
        %2817 = vmatpush1.bf16.msra.mxu0 0
        %2818 = vmatprep.subr.bf16.mxu0 0
        %2819 = vmatpush1.bf16.msra.mxu0 0
        %2820 = vmatprep.mubr.bf16.mxu0 0
        %2821 = vmatmul.mubr.bf16.gmra.mrb[0].mxu0 %v2639
        %v2822 = vpop.f32.mrb[0].mxu0
        %v2823 = vadd.f32 0.0, %v2822
        %v2824 = vpop.f32.mrb[0].mxu0
        %v2825 = vadd.f32 0.0, %v2824
        %v2826 = vpop.f32.mrb[0].mxu0
        %v2827 = vpop.f32.mrb[0].mxu0
        %2828 = vdwg.mxu0
        %v2829 = vmul.f32 %v2700, %v1110
        %v2830 = vmul.f32 %v2702, %v1114
        %v2831 = vmul.f32 %v2741, %v1118
        %v2832 = vmul.f32 %v2743, %v1122
        %v2833 = vmul.f32 %v2782, %v1126
        %v2834 = vmul.f32 %v2784, %v1130
        %v2835 = vmul.f32 %v2823, %v1134
        %v2836 = vmul.f32 %v2825, %v1138
        %v2837 = vadd.f32 %v2554, %v2829
        %v2838 = vadd.f32 %v2555, %v2830
        %v2839 = vadd.f32 %v2556, %v2831
        %v2840 = vadd.f32 %v2557, %v2832
        %v2841 = vadd.f32 %v2558, %v2833
        %v2842 = vadd.f32 %v2559, %v2834
        %v2843 = vadd.f32 %v2560, %v2835
        %v2844 = vadd.f32 %v2561, %v2836
        %v2845 = vld [vmem:[%s3] sm:$0xff]
        %2847 = vset.pattern.permute.xlu0 0
        %2848 = vperm.xlu0 %2847, %v2845
        %v2849 = vpop.permute.xlu0 %2848
        %v2851 = vadd.f32 %v2837, %v2849
        %v2852 = vadd.f32 %v2838, %v2849
        %v2853 = vadd.f32 %v2839, %v2849
        %v2854 = vadd.f32 %v2840, %v2849
        %v2855 = vadd.f32 %v2841, %v2849
        %v2856 = vadd.f32 %v2842, %v2849
        %v2857 = vadd.f32 %v2843, %v2849
        %v2858 = vadd.f32 %v2844, %v2849
        %2859 = vst [vmem:[%s245] sm:$0xff] %v2851
        %2860 = vst [vmem:[%s245 + $0x8] sm:$0xff] %v2852
        %2861 = vst [vmem:[%s245 + $0x10] sm:$0xff] %v2853
        %2862 = vst [vmem:[%s245 + $0x18] sm:$0xff] %v2854
        %2863 = vst [vmem:[%s245 + $0x20] sm:$0xff] %v2855
        %2864 = vst [vmem:[%s245 + $0x28] sm:$0xff] %v2856
        %2865 = vst [vmem:[%s245 + $0x30] sm:$0xff] %v2857
        %2866 = vst [vmem:[%s245 + $0x38] sm:$0xff] %v2858
        %v2867 = vadd.f32 %v2851, %v2852
        %v2868 = vadd.f32 %v2867, %v2853
        %v2869 = vadd.f32 %v2868, %v2854
        %v2870 = vadd.f32 %v2869, %v2855
        %v2871 = vadd.f32 %v2870, %v2856
        %v2872 = vadd.f32 %v2871, %v2857
        %v2873 = vadd.f32 %v2872, %v2858
        %2874 = vadd.xlane.f32.xlu0 %v2873
        %v2875 = vpop.xlane.xlu0 %2874
        %v2876 = vmul.f32 %v2875, 0.0009765625
        %v2877 = vsub.f32 %v2851, %v2876
        %v2878 = vsub.f32 %v2852, %v2876
        %v2879 = vsub.f32 %v2853, %v2876
        %v2880 = vsub.f32 %v2854, %v2876
        %v2881 = vsub.f32 %v2855, %v2876
        %v2882 = vsub.f32 %v2856, %v2876
        %v2883 = vsub.f32 %v2857, %v2876
        %v2884 = vsub.f32 %v2858, %v2876
        %v2885 = vmul.f32 %v2877, %v2877
        %v2886 = vmul.f32 %v2878, %v2878
        %v2887 = vmul.f32 %v2879, %v2879
        %v2888 = vmul.f32 %v2880, %v2880
        %v2889 = vmul.f32 %v2881, %v2881
        %v2890 = vmul.f32 %v2882, %v2882
        %v2891 = vmul.f32 %v2883, %v2883
        %v2892 = vmul.f32 %v2884, %v2884
        %v2893 = vadd.f32 %v2885, %v2886
        %v2894 = vadd.f32 %v2893, %v2887
        %v2895 = vadd.f32 %v2894, %v2888
        %v2896 = vadd.f32 %v2895, %v2889
        %v2897 = vadd.f32 %v2896, %v2890
        %v2898 = vadd.f32 %v2897, %v2891
        %v2899 = vadd.f32 %v2898, %v2892
        %2900 = vadd.xlane.f32.xlu0 %v2899
        %v2901 = vpop.xlane.xlu0 %2900
        %vm2902 = vcmask 7168
        %2903 = vst.msk [vmem:[%s266] sm:$0xff] %vm2902, %v2875
        %2904 = vst.msk [vmem:[%s270] sm:$0xff] %vm2902, %v2901
        %s2905 = sand.u32 %s118, 1
        %s2906 = scalar_lea.sflag [#allocation3], %s2905
        %s2907 = sand.u32 %s118, 1
        %s2908 = smul.addr %s2907, 64
        %s2909 = scalar_lea.vmem [#allocation2], %s2908
        %p2910 = scmp.lt.s32.totalorder %s21, 1
        %s2911 = scalar_select %p2910, %s21, 1
        %s2912 = smul.addr %s2911, 8
        %s2913 = scalar_lea.vmem %s5, %s2912
        %p2914 = scmp.lt.s32.totalorder %s21, 1
        %s2915 = scalar_select %p2914, %s21, 1
        %s2916 = smul.addr %s2915, 8
        %s2917 = scalar_lea.vmem %s6, %s2916
        // Predicated region
        $region37: #{tpu_custom_call.1} parent=35 // pred_check
          %p2918 = pneg %p128
        $region38: #{tpu_custom_call.1} parent=35 // pred_check_branch
          %2920 = sbr.rel (%p2918) target = $region40
        $region39: #{tpu_custom_call.1} parent=35 // pred_region
          %s2922 = ssub.s32 1024, 1024
          %2923 = vsyncadd %s2906, %s2922
          %s2924 = smul.addr %s21, 8
          %s2925 = smul.addr %s2924, 128
          %s2926 = scalar_lea.hbm %s4, %s2925
          %s2928 = sshll.u32 %s2909, 4
          %s2929 = int_to_ptr.vmem [resolvable:$true] %s2928
          %2931 = dma.vmem_to_hbm [thread:$0]  %s2929, 1024, %s2926, %s2906
        $region40: #{tpu_custom_call.1} parent=35 // pred_fallthru
          _
        // Predicated region
        $region41: #{tpu_custom_call.1} parent=35 // pred_check
          %p2932 = pneg %p154
        $region42: #{tpu_custom_call.1} parent=35 // pred_check_branch
          %2934 = sbr.rel (%p2932) target = $region44
        $region43: #{tpu_custom_call.1} parent=35 // pred_region
          _
        $region44: #{tpu_custom_call.1} parent=35 // pred_fallthru
          _
        // Predicated region
        $region45: #{tpu_custom_call.1} parent=35 // pred_check
          %p2935 = pneg %p180
        $region46: #{tpu_custom_call.1} parent=35 // pred_check_branch
          %2937 = sbr.rel (%p2935) target = $region48
        $region47: #{tpu_custom_call.1} parent=35 // pred_region
          _
        $region48: #{tpu_custom_call.1} parent=35 // pred_fallthru
          _
      $region36: #{tpu_custom_call.1} parent=5 // pred_fallthru
        _
      %p2938 = scmp.le.s32.totalorder 2, %s16
      // Predicated region
      $region49: #{tpu_custom_call.1} parent=5 // pred_check
        %p2939 = pneg %p2938
      $region50: #{tpu_custom_call.1} parent=5 // pred_check_branch
        %2941 = sbr.rel (%p2939) target = $region52
      $region51: #{tpu_custom_call.1} parent=5 // pred_region
        %s2942 = ssub.s32 %s16, 2
        // Predicated region
        $region53: #{tpu_custom_call.1} parent=51 // pred_check
          %p2943 = pneg %p134
        $region54: #{tpu_custom_call.1} parent=51 // pred_check_branch
          %2945 = sbr.rel (%p2943) target = $region56
        $region55: #{tpu_custom_call.1} parent=51 // pred_region
          %s2946 = sand.u32 %s119, 1
          %s2947 = scalar_lea.sflag [#allocation3], %s2946
          %s2948 = sand.u32 %s119, 1
          %s2949 = smul.addr %s2948, 64
          %s2950 = scalar_lea.vmem [#allocation2], %s2949
          %2951 = dma.done %s2947, 1024
        $region56: #{tpu_custom_call.1} parent=51 // pred_fallthru
          _
        // Predicated region
        $region57: #{tpu_custom_call.1} parent=51 // pred_check
          %p2952 = pneg %p160
        $region58: #{tpu_custom_call.1} parent=51 // pred_check_branch
          %2954 = sbr.rel (%p2952) target = $region60
        $region59: #{tpu_custom_call.1} parent=51 // pred_region
          %p2955 = scmp.lt.s32.totalorder %s22, 1
          %s2956 = scalar_select %p2955, %s22, 1
          %s2957 = smul.addr %s2956, 8
          %s2958 = scalar_lea.vmem %s5, %s2957
        $region60: #{tpu_custom_call.1} parent=51 // pred_fallthru
          _
        // Predicated region
        $region61: #{tpu_custom_call.1} parent=51 // pred_check
          %p2959 = pneg %p186
        $region62: #{tpu_custom_call.1} parent=51 // pred_check_branch
          %2961 = sbr.rel (%p2959) target = $region64
        $region63: #{tpu_custom_call.1} parent=51 // pred_region
          %p2962 = scmp.lt.s32.totalorder %s22, 1
          %s2963 = scalar_select %p2962, %s22, 1
          %s2964 = smul.addr %s2963, 8
          %s2965 = scalar_lea.vmem %s6, %s2964
        $region64: #{tpu_custom_call.1} parent=51 // pred_fallthru
          _
      $region52: #{tpu_custom_call.1} parent=5 // pred_fallthru
        _
    $region6: #{tpu_custom_call.1} parent=1 // loop_footer
      %s20 = sadd.s32 1, %s16
    $region7: #{tpu_custom_call.1} parent=1 // loop_footer_branch
      %15 = sbr.rel target = $region3
    $region8: #{tpu_custom_call.1} parent=1 // loop_exit
      _
    %2966 = vsyncpa [#allocation3], 1
    %s2967 = scalar_lea.sflag [#allocation3], 1
    %2968 = vsyncpa %s2967, 1

</llo_original>
